<compile_context>
chip_gen: v6e
topology: v6e:2x2x1
jax: 0.10.0
libtpu: 0.0.40
codegen_flags: <defaults>
</compile_context>

<pallas_src>
import functools

import jax
import jax.numpy as jnp
from jax import lax
from jax.experimental import pallas as pl
from jax.experimental.pallas import tpu as pltpu

# MXU operand dtype (accumulation, bias and the epilogue are always f32).
COMPUTE_DTYPE = jnp.bfloat16


def _round_up(x, m):
    return ((x + m - 1) // m) * m


# ----------------------------- Pallas kernel ----------------------------------

def _gemm_bias_kernel(w_ref, a_ref, b_ref, o_ref, *, relu):
    # o[Nout, TM] = [relu]( W[Nout, K] @ A[K, TM] + bias[Nout, 1] )
    acc = jnp.dot(w_ref[...], a_ref[...], preferred_element_type=jnp.float32)
    acc = acc + b_ref[...]
    if relu:
        acc = jnp.maximum(acc, 0.0)
    o_ref[...] = acc.astype(o_ref.dtype)


def _choose_tile_m(M):
    """Lane (M) tile: multiple of 128, >=2 grid steps when M > 128 (v7x dual-TC),
    capped at 2048 lanes (fits comfortably in VMEM on v5e/v6e/v7x at these K/n_out)."""
    if M <= 128:
        return M                      # single full tile (block == full array dims)
    half = _round_up((M + 1) // 2, 128)
    return max(128, min(2048, half))


def fused_gemm(w, a, bias, relu=True):
    """out[Nout, M] = [relu]( w[Nout, K] @ a[K, M] + bias[Nout] ).

    Lane-dense orientation: the large spatial axis M sits on the 128-lane axis of the
    output block.  No operand padding: K stays un-tiled (block K == full K, exact
    contraction) and the last M tile may be ragged (Pallas clips OOB writes, so edge
    garbage never reaches HBM).
    """
    n_out, K = w.shape
    k2, M = a.shape
    assert K == k2
    tm = _choose_tile_m(M)
    grid = (pl.cdiv(M, tm),)

    return pl.pallas_call(
        functools.partial(_gemm_bias_kernel, relu=relu),
        out_shape=jax.ShapeDtypeStruct((n_out, M), jnp.float32),
        grid=grid,
        in_specs=[
            pl.BlockSpec((n_out, K), lambda i: (0, 0)),   # weights (resident, fetched once)
            pl.BlockSpec((K, tm), lambda i: (0, i)),      # activation tile, lane = M
            pl.BlockSpec((n_out, 1), lambda i: (0, 0)),   # folded-BN bias (f32, resident)
        ],
        out_specs=pl.BlockSpec((n_out, tm), lambda i: (0, i)),
        compiler_params=pltpu.CompilerParams(dimension_semantics=("parallel",)),
    )(w.astype(COMPUTE_DTYPE), a.astype(COMPUTE_DTYPE),
      bias.reshape(n_out, 1).astype(jnp.float32))


# ----------------------------- conv plumbing (glue) ---------------------------

def im2col_cm(x_cm, k, stride, pad_lo, pad_hi):
    """x_cm: [C, N, D, H, W] -> patches [k^3*C, N*Do*Ho*Wo] (taps major, C minor)."""
    # TODO(synk): fuse this tap gather into the GEMM kernel (grid axis over the k^3
    # taps + f32 VMEM accumulator with pl.when init/finalize + per-tap shifted-window
    # indexing / manual strided DMA of the padded input) so the k^3-inflated patch
    # matrix is never materialized in HBM.
    x_cm = x_cm.astype(COMPUTE_DTYPE)            # halve the dominant A-stream bytes
    C, N, D, H, W = x_cm.shape
    xp = jnp.pad(x_cm, ((0, 0), (0, 0), (pad_lo, pad_hi), (pad_lo, pad_hi), (pad_lo, pad_hi)))
    Do = (D + pad_lo + pad_hi - k) // stride + 1
    Ho = (H + pad_lo + pad_hi - k) // stride + 1
    Wo = (W + pad_lo + pad_hi - k) // stride + 1
    cols = []
    for kd in range(k):
        for kh in range(k):
            for kw in range(k):
                cols.append(xp[:, :,
                               kd:kd + Do * stride:stride,
                               kh:kh + Ho * stride:stride,
                               kw:kw + Wo * stride:stride])
    p = jnp.stack(cols, axis=0)                  # [k^3, C, N, Do, Ho, Wo]
    return p.reshape(k ** 3 * C, N * Do * Ho * Wo), (N, Do, Ho, Wo)


def fold_bn(bn, eps=1e-5):
    gamma, beta, mean, var = bn
    scale = gamma / jnp.sqrt(var + eps)
    bias = beta - mean * scale
    return scale, bias


# phase selector: S[parity r, tap-offset o, transposed-conv tap t]
#   even output rows use wt[tap=1] at offset 0; odd rows use wt[2]@off0 + wt[0]@off1.
_PHASE_SEL = jnp.array(
    [[[0.0, 1.0, 0.0], [0.0, 0.0, 0.0]],
     [[0.0, 0.0, 1.0], [1.0, 0.0, 0.0]]], jnp.float32)


# ----------------------------- one-time weight prep ---------------------------

def _prep_conv(w, bn):
    """Conv3d weight + BN folded into a flat GEMM weight [Cout, k^3*Cin] + f32 bias."""
    cout, cin, k = w.shape[0], w.shape[1], w.shape[2]
    scale, bias = fold_bn(bn)
    wf = w * scale[:, None, None, None, None]
    # column order matches im2col: (kd,kh,kw) major, Cin minor
    w2 = wf.transpose(0, 2, 3, 4, 1).reshape(cout, k ** 3 * cin)
    return w2.astype(COMPUTE_DTYPE), bias.astype(jnp.float32)


def _prep_deconv_with_redir(wt, bn, wr, bnr):
    """ConvTranspose3d(k=3,s=2,p=1,op=1,no bias) + BN with the 1x1 redir conv fused.

    The transposed conv is decomposed into a stride-1 2x2x2 conv producing 8*Cout
    phase channels on the un-dilated input (no 8x zero-stuffed upsample).  The redir
    1x1 conv becomes a phase-block-diagonal weight acting on the phase-unshuffled skip
    input, K-concatenated onto the same GEMM, so relu(deconv + redir) is one kernel.
    """
    cin, cout = wt.shape[0], wt.shape[1]
    S = _PHASE_SEL
    # wp[rd,rh,rw,cout,cin,od,oh,ow] = sum_t S[rd,od,td] S[rh,oh,th] S[rw,ow,tw] wt[cin,cout,td,th,tw]
    wp = jnp.einsum('apt,bqu,csv,iotuv->abcoipqs', S, S, S, wt)
    wp = wp.reshape(8 * cout, cin, 2, 2, 2)
    scale, bias = fold_bn(bn)
    wp = wp * jnp.tile(scale, 8)[:, None, None, None, None]
    w_dec = wp.transpose(0, 2, 3, 4, 1).reshape(8 * cout, 8 * cin)

    scale_r, bias_r = fold_bn(bnr)
    wr2 = wr[:, :, 0, 0, 0] * scale_r[:, None]                 # [cout, c_skip]
    w_red = jnp.kron(jnp.eye(8, dtype=wr2.dtype), wr2)         # phase-block-diagonal

    w_full = jnp.concatenate([w_dec, w_red], axis=1).astype(COMPUTE_DTYPE)
    bias_full = jnp.tile(bias + bias_r, 8).astype(jnp.float32)  # rows are (phase, cout)
    return w_full, bias_full


def prepare_params(p):
    """Fold BN / phase-decompose / flatten all weights once (not per forward call)."""
    return {
        'c1': _prep_conv(p['w1'], p['bn1']),
        'c2': _prep_conv(p['w2'], p['bn2']),
        'c3': _prep_conv(p['w3'], p['bn3']),
        'c4': _prep_conv(p['w4'], p['bn4']),
        'd5': _prep_deconv_with_redir(p['wt5'], p['bn5'], p['wr2'], p['bnr2']),
        'd6': _prep_deconv_with_redir(p['wt6'], p['bn6'], p['wr1'], p['bnr1']),
    }


# ----------------------------- hourglass forward ------------------------------

def conv3d_bn(x_cm, prep, k, stride, pad, relu=True):
    """Conv3d (no bias) + folded BatchNorm3d [+ ReLU] as one fused GEMM; CNDHW acts."""
    w2, bias = prep
    patches, (N, Do, Ho, Wo) = im2col_cm(x_cm, k, stride, pad, pad)
    out2d = fused_gemm(w2, patches, bias, relu=relu)
    return out2d.reshape(w2.shape[0], N, Do, Ho, Wo)


def deconv3d_bn_redir(x_cm, skip_cm, prep):
    """relu( ConvTranspose3d(x)+BN  +  redir-1x1-conv(skip)+BN ) in a single GEMM."""
    w_full, bias_full = prep
    cout = w_full.shape[0] // 8
    cin, N, D, H, W = x_cm.shape
    c_skip = skip_cm.shape[0]
    patches, _ = im2col_cm(x_cm, 2, 1, 0, 1)                    # [8*Cin, N*D*H*W]
    # phase-unshuffle the high-res skip input so the 1x1 redir conv rides the same GEMM
    u = skip_cm.astype(COMPUTE_DTYPE).reshape(c_skip, N, D, 2, H, 2, W, 2)
    u = u.transpose(3, 5, 7, 0, 1, 2, 4, 6).reshape(8 * c_skip, N * D * H * W)
    a = jnp.concatenate([patches, u], axis=0)                   # extra K rows, no HBM r
    y = fused_gemm(w_full, a, bias_full, relu=True)             # [8*Cout, N*D*H*W]
    # pixel shuffle back to CNDHW.
    # TODO(synk): write the output directly phase-interleaved via the out BlockSpec (or
    # keep a phase-major inter-layer layout) to drop this XLA transpose.
    y = y.reshape(2, 2, 2, cout, N, D, H, W)
    return y.transpose(3, 4, 5, 0, 6, 1, 7, 2).reshape(cout, N, 2 * D, 2 * H, 2 * W)


def hourglass_forward(x, prep):
    # internal layout: CNDHW; convert only at the module boundary.
    xc = x.transpose(1, 0, 2, 3, 4)
    c1 = conv3d_bn(xc, prep['c1'], 3, 2, 1)                     # conv1
    c2 = conv3d_bn(c1, prep['c2'], 3, 1, 1)                     # conv2
    c3 = conv3d_bn(c2, prep['c3'], 3, 2, 1)                     # conv3
    c4 = conv3d_bn(c3, prep['c4'], 3, 1, 1)                     # conv4
    c5 = deconv3d_bn_redir(c4, c2, prep['d5'])                  # relu(conv5 + redir2(c2))
    c6 = deconv3d_bn_redir(c5, xc, prep['d6'])                  # relu(conv6 + redir1(x))
    return c6.transpose(1, 0, 2, 3, 4)


# ----------------------------- deterministic params ---------------------------

def init_params(key, c):
    def conv_w(k, cout, cin, ksz):
        fan = cin * ksz ** 3
        return jax.random.normal(k, (cout, cin, ksz, ksz, ksz), jnp.float32) / jnp.sqrt(fan)

    def bn(k, ch):
        k1, k2, k3, k4 = jax.random.split(k, 4)
        gamma = jax.random.uniform(k1, (ch,), jnp.float32, 0.5, 1.5)
        beta = 0.1 * jax.random.normal(k2, (ch,), jnp.float32)
        mean = 0.1 * jax.random.normal(k3, (ch,), jnp.float32)
        var = jax.random.uniform(k4, (ch,), jnp.float32, 0.5, 1.5)
        return gamma, beta, mean, var

    ks = jax.random.split(key, 16)
    p = {}
    p['w1'] = conv_w(ks[0], 2 * c, c, 3);       p['bn1'] = bn(ks[1], 2 * c)
    p['w2'] = conv_w(ks[2], 2 * c, 2 * c, 3);   p['bn2'] = bn(ks[3], 2 * c)
    p['w3'] = conv_w(ks[4], 4 * c, 2 * c, 3);   p['bn3'] = bn(ks[5], 4 * c)
    p['w4'] = conv_w(ks[6], 4 * c, 4 * c, 3);   p['bn4'] = bn(ks[7], 4 * c)
    # ConvTranspose3d weights have shape [Cin, Cout, kD, kH, kW]
    p['wt5'] = jax.random.normal(ks[8], (4 * c, 2 * c, 3, 3, 3), jnp.float32) / jnp.sqrt(4 * c * 27)
    p['bn5'] = bn(ks[9], 2 * c)
    p['wt6'] = jax.random.normal(ks[10], (2 * c, c, 3, 3, 3), jnp.float32) / jnp.sqrt(2 * c * 27)
    p['bn6'] = bn(ks[11], c)
    p['wr1'] = conv_w(ks[12], c, c, 1);         p['bnr1'] = bn(ks[13], c)
    p['wr2'] = conv_w(ks[14], 2 * c, 2 * c, 1); p['bnr2'] = bn(ks[15], 2 * c)
    return p


# ----------------------------- pure-JAX reference (f32) -----------------------

def _ref_convbn(x, w, bn, stride, pad, relu):
    scale, bias = fold_bn(bn)
    wf = w * scale[:, None, None, None, None]
    y = lax.conv_general_dilated(x, wf, (stride,) * 3, [(pad, pad)] * 3,
                                 dimension_numbers=('NCDHW', 'OIDHW', 'NCDHW'))
    y = y + bias[None, :, None, None, None]
    return jnp.maximum(y, 0.0) if relu else y


def _ref_deconvbn(x, wt, bn):
    scale, bias = fold_bn(bn)
    w = jnp.flip(wt, axis=(2, 3, 4)).transpose(1, 0, 2, 3, 4)
    wf = w * scale[:, None, None, None, None]
    y = lax.conv_general_dilated(x, wf, (1, 1, 1), [(1, 2)] * 3, lhs_dilation=(2, 2, 2),
                                 dimension_numbers=('NCDHW', 'OIDHW', 'NCDHW'))
    return y + bias[None, :, None, None, None]


def hourglass_reference(x, p):
    c1 = _ref_convbn(x, p['w1'], p['bn1'], 2, 1, True)
    c2 = _ref_convbn(c1, p['w2'], p['bn2'], 1, 1, True)
    c3 = _ref_convbn(c2, p['w3'], p['bn3'], 2, 1, True)
    c4 = _ref_convbn(c3, p['w4'], p['bn4'], 1, 1, True)
    c5 = jnp.maximum(_ref_deconvbn(c4, p['wt5'], p['bn5'])
                     + _ref_convbn(c2, p['wr2'], p['bnr2'], 1, 0, False), 0.0)
    c6 = jnp.maximum(_ref_deconvbn(c5, p['wt6'], p['bn6'])
                     + _ref_convbn(x, p['wr1'], p['bnr1'], 1, 0, False), 0.0)
    return c6


# ----------------------------------- main -------------------------------------

if __name__ == "__main__":
    key = jax.random.PRNGKey(0)
    kx, kp = jax.random.split(key)
    C = 4                                  # in_channels
    x = jax.random.normal(kx, (2, C, 8, 16, 16), jnp.float32)   # NCDHW
    params = init_params(kp, C)

    prep = prepare_params(params)          # one-time: fold BN, phase-decompose, flatten
    fwd = jax.jit(hourglass_forward)
    out = jax.block_until_ready(fwd(x, prep))

    ref = hourglass_reference(x, params)   # f32 reference
    assert out.shape == x.shape, (out.shape, x.shape)
    assert bool(jnp.isfinite(out).all())

    err = jnp.abs(out - ref)
    max_err = float(jnp.max(err))
    mean_err = float(jnp.mean(err))
    ref_max = float(jnp.max(jnp.abs(ref)))
    # bf16 MXU operands through a 6-layer conv cascade (f32 accumulation/epilogue):
    # validate semantics with a precision-appropriate tolerance.
    assert mean_err < 2e-2, f"mean abs error {mean_err}"
    assert max_err < 5e-2 * max(1.0, ref_max), f"max abs error {max_err} (ref max {ref_max})"
    print("KERNEL_OK")
</pallas_src>

<mosaic_0001>
module attributes {stable_mosaic.version = 11 : i64} {
  func.func @_gemm_bias_kernel(%arg0: i32, %arg1: memref<8x108xbf16, #tpu.memory_space<vmem>>, %arg2: memref<108x256xbf16, #tpu.memory_space<vmem>>, %arg3: memref<8x1xf32, #tpu.memory_space<vmem>>, %arg4: memref<8x256xf32, #tpu.memory_space<vmem>>) attributes {dimension_semantics = [#tpu.dimension_semantics<parallel>], iteration_bounds = array<i64: 2>, scalar_prefetch = 0 : i64, scratch_operands = 0 : i64, tpu.core_type = #tpu.core_type<tc>, window_params = [{pipeline_mode = #tpu.pipeline_mode<synchronous>, transform_indices = @transform_0, window_bounds = array<i64: 8, 108>}, {transform_indices = @transform_1, window_bounds = array<i64: 108, 256>}, {pipeline_mode = #tpu.pipeline_mode<synchronous>, transform_indices = @transform_2, window_bounds = array<i64: 8, 1>}, {transform_indices = @transform_3, window_bounds = array<i64: 8, 256>}]} {
    %c0 = arith.constant 0 : index
    %c0_0 = arith.constant 0 : index
    %0 = vector.load %arg1[%c0, %c0_0] : memref<8x108xbf16, #tpu.memory_space<vmem>>, vector<8x108xbf16>
    %c0_1 = arith.constant 0 : index
    %c0_2 = arith.constant 0 : index
    %1 = vector.load %arg2[%c0_1, %c0_2] : memref<108x256xbf16, #tpu.memory_space<vmem>>, vector<108x256xbf16>
    %cst = arith.constant dense<0.000000e+00> : vector<8x256xf32>
    %2 = tpu.matmul %0, %1, %cst {dimension_numbers = #tpu.dot_dimension_numbers<[1], [0], [0], [1], [0, 0, 1, 1], [], []>} : vector<8x108xbf16>, vector<108x256xbf16>, vector<8x256xf32> -> vector<8x256xf32>
    %c0_3 = arith.constant 0 : index
    %c0_4 = arith.constant 0 : index
    %3 = vector.load %arg3[%c0_3, %c0_4] : memref<8x1xf32, #tpu.memory_space<vmem>>, vector<8x1xf32>
    %4 = vector.broadcast %3 : vector<8x1xf32> to vector<8x256xf32>
    %5 = arith.addf %2, %4 : vector<8x256xf32>
    %cst_5 = arith.constant 0.000000e+00 : f32
    %6 = vector.broadcast %cst_5 : f32 to vector<8x256xf32>
    %7 = arith.maximumf %5, %6 : vector<8x256xf32>
    %c0_6 = arith.constant 0 : index
    %c0_7 = arith.constant 0 : index
    %8 = vector.load %arg4[%c0_6, %c0_7] : memref<8x256xf32, #tpu.memory_space<vmem>>, vector<8x256xf32>
    tpu.vector_store %arg4[%c0_6, %c0_7], %7 {strides = array<i32>} : memref<8x256xf32, #tpu.memory_space<vmem>>, vector<8x256xf32>,
    return
  }
  func.func @transform_0(%arg0: i32) -> (i32, i32) {
    %c0_i32 = arith.constant 0 : i32
    %c0_i32_0 = arith.constant 0 : i32
    %c0_i32_1 = arith.constant 0 : i32
    return %c0_i32, %c0_i32_0 : i32, i32
  }
  func.func @transform_1(%arg0: i32) -> (i32, i32) {
    %c0_i32 = arith.constant 0 : i32
    %c0_i32_0 = arith.constant 0 : i32
    return %c0_i32, %arg0 : i32, i32
  }
  func.func @transform_2(%arg0: i32) -> (i32, i32) {
    %c0_i32 = arith.constant 0 : i32
    %c0_i32_0 = arith.constant 0 : i32
    %c0_i32_1 = arith.constant 0 : i32
    return %c0_i32, %c0_i32_0 : i32, i32
  }
  func.func @transform_3(%arg0: i32) -> (i32, i32) {
    %c0_i32 = arith.constant 0 : i32
    %c0_i32_0 = arith.constant 0 : i32
    return %c0_i32, %arg0 : i32, i32
  }
}

module attributes {stable_mosaic.version = 11 : i64} {
  func.func @_gemm_bias_kernel(%arg0: i32, %arg1: memref<8x216xbf16, #tpu.memory_space<vmem>>, %arg2: memref<216x256xbf16, #tpu.memory_space<vmem>>, %arg3: memref<8x1xf32, #tpu.memory_space<vmem>>, %arg4: memref<8x256xf32, #tpu.memory_space<vmem>>) attributes {dimension_semantics = [#tpu.dimension_semantics<parallel>], iteration_bounds = array<i64: 2>, scalar_prefetch = 0 : i64, scratch_operands = 0 : i64, tpu.core_type = #tpu.core_type<tc>, window_params = [{pipeline_mode = #tpu.pipeline_mode<synchronous>, transform_indices = @transform_0, window_bounds = array<i64: 8, 216>}, {transform_indices = @transform_1, window_bounds = array<i64: 216, 256>}, {pipeline_mode = #tpu.pipeline_mode<synchronous>, transform_indices = @transform_2, window_bounds = array<i64: 8, 1>}, {transform_indices = @transform_3, window_bounds = array<i64: 8, 256>}]} {
    %c0 = arith.constant 0 : index
    %c0_0 = arith.constant 0 : index
    %0 = vector.load %arg1[%c0, %c0_0] : memref<8x216xbf16, #tpu.memory_space<vmem>>, vector<8x216xbf16>
    %c0_1 = arith.constant 0 : index
    %c0_2 = arith.constant 0 : index
    %1 = vector.load %arg2[%c0_1, %c0_2] : memref<216x256xbf16, #tpu.memory_space<vmem>>, vector<216x256xbf16>
    %cst = arith.constant dense<0.000000e+00> : vector<8x256xf32>
    %2 = tpu.matmul %0, %1, %cst {dimension_numbers = #tpu.dot_dimension_numbers<[1], [0], [0], [1], [0, 0, 1, 1], [], []>} : vector<8x216xbf16>, vector<216x256xbf16>, vector<8x256xf32> -> vector<8x256xf32>
    %c0_3 = arith.constant 0 : index
    %c0_4 = arith.constant 0 : index
    %3 = vector.load %arg3[%c0_3, %c0_4] : memref<8x1xf32, #tpu.memory_space<vmem>>, vector<8x1xf32>
    %4 = vector.broadcast %3 : vector<8x1xf32> to vector<8x256xf32>
    %5 = arith.addf %2, %4 : vector<8x256xf32>
    %cst_5 = arith.constant 0.000000e+00 : f32
    %6 = vector.broadcast %cst_5 : f32 to vector<8x256xf32>
    %7 = arith.maximumf %5, %6 : vector<8x256xf32>
    %c0_6 = arith.constant 0 : index
    %c0_7 = arith.constant 0 : index
    %8 = vector.load %arg4[%c0_6, %c0_7] : memref<8x256xf32, #tpu.memory_space<vmem>>, vector<8x256xf32>
    tpu.vector_store %arg4[%c0_6, %c0_7], %7 {strides = array<i32>} : memref<8x256xf32, #tpu.memory_space<vmem>>, vector<8x256xf32>,
    return
  }
  func.func @transform_0(%arg0: i32) -> (i32, i32) {
    %c0_i32 = arith.constant 0 : i32
    %c0_i32_0 = arith.constant 0 : i32
    %c0_i32_1 = arith.constant 0 : i32
    return %c0_i32, %c0_i32_0 : i32, i32
  }
  func.func @transform_1(%arg0: i32) -> (i32, i32) {
    %c0_i32 = arith.constant 0 : i32
    %c0_i32_0 = arith.constant 0 : i32
    return %c0_i32, %arg0 : i32, i32
  }
  func.func @transform_2(%arg0: i32) -> (i32, i32) {
    %c0_i32 = arith.constant 0 : i32
    %c0_i32_0 = arith.constant 0 : i32
    %c0_i32_1 = arith.constant 0 : i32
    return %c0_i32, %c0_i32_0 : i32, i32
  }
  func.func @transform_3(%arg0: i32) -> (i32, i32) {
    %c0_i32 = arith.constant 0 : i32
    %c0_i32_0 = arith.constant 0 : i32
    return %c0_i32, %arg0 : i32, i32
  }
}

module attributes {stable_mosaic.version = 11 : i64} {
  func.func @_gemm_bias_kernel(%arg0: i32, %arg1: memref<16x216xbf16, #tpu.memory_space<vmem>>, %arg2: memref<216x64xbf16, #tpu.memory_space<vmem>>, %arg3: memref<16x1xf32, #tpu.memory_space<vmem>>, %arg4: memref<16x64xf32, #tpu.memory_space<vmem>>) attributes {dimension_semantics = [#tpu.dimension_semantics<parallel>], iteration_bounds = array<i64: 1>, scalar_prefetch = 0 : i64, scratch_operands = 0 : i64, tpu.core_type = #tpu.core_type<tc>, window_params = [{pipeline_mode = #tpu.pipeline_mode<synchronous>, transform_indices = @transform_0, window_bounds = array<i64: 16, 216>}, {transform_indices = @transform_1, window_bounds = array<i64: 216, 64>}, {pipeline_mode = #tpu.pipeline_mode<synchronous>, transform_indices = @transform_2, window_bounds = array<i64: 16, 1>}, {transform_indices = @transform_3, window_bounds = array<i64: 16, 64>}]} {
    %c0 = arith.constant 0 : index
    %c0_0 = arith.constant 0 : index
    %0 = vector.load %arg1[%c0, %c0_0] : memref<16x216xbf16, #tpu.memory_space<vmem>>, vector<16x216xbf16>
    %c0_1 = arith.constant 0 : index
    %c0_2 = arith.constant 0 : index
    %1 = vector.load %arg2[%c0_1, %c0_2] : memref<216x64xbf16, #tpu.memory_space<vmem>>, vector<216x64xbf16>
    %cst = arith.constant dense<0.000000e+00> : vector<16x64xf32>
    %2 = tpu.matmul %0, %1, %cst {dimension_numbers = #tpu.dot_dimension_numbers<[1], [0], [0], [1], [0, 0, 1, 1], [], []>} : vector<16x216xbf16>, vector<216x64xbf16>, vector<16x64xf32> -> vector<16x64xf32>
    %c0_3 = arith.constant 0 : index
    %c0_4 = arith.constant 0 : index
    %3 = vector.load %arg3[%c0_3, %c0_4] : memref<16x1xf32, #tpu.memory_space<vmem>>, vector<16x1xf32>
    %4 = vector.broadcast %3 : vector<16x1xf32> to vector<16x64xf32>
    %5 = arith.addf %2, %4 : vector<16x64xf32>
    %cst_5 = arith.constant 0.000000e+00 : f32
    %6 = vector.broadcast %cst_5 : f32 to vector<16x64xf32>
    %7 = arith.maximumf %5, %6 : vector<16x64xf32>
    %c0_6 = arith.constant 0 : index
    %c0_7 = arith.constant 0 : index
    %8 = vector.load %arg4[%c0_6, %c0_7] : memref<16x64xf32, #tpu.memory_space<vmem>>, vector<16x64xf32>
    tpu.vector_store %arg4[%c0_6, %c0_7], %7 {strides = array<i32>} : memref<16x64xf32, #tpu.memory_space<vmem>>, vector<16x64xf32>,
    return
  }
  func.func @transform_0(%arg0: i32) -> (i32, i32) {
    %c0_i32 = arith.constant 0 : i32
    %c0_i32_0 = arith.constant 0 : i32
    %c0_i32_1 = arith.constant 0 : i32
    return %c0_i32, %c0_i32_0 : i32, i32
  }
  func.func @transform_1(%arg0: i32) -> (i32, i32) {
    %c0_i32 = arith.constant 0 : i32
    %c0_i32_0 = arith.constant 0 : i32
    return %c0_i32, %arg0 : i32, i32
  }
  func.func @transform_2(%arg0: i32) -> (i32, i32) {
    %c0_i32 = arith.constant 0 : i32
    %c0_i32_0 = arith.constant 0 : i32
    %c0_i32_1 = arith.constant 0 : i32
    return %c0_i32, %c0_i32_0 : i32, i32
  }
  func.func @transform_3(%arg0: i32) -> (i32, i32) {
    %c0_i32 = arith.constant 0 : i32
    %c0_i32_0 = arith.constant 0 : i32
    return %c0_i32, %arg0 : i32, i32
  }
}

module attributes {stable_mosaic.version = 11 : i64} {
  func.func @_gemm_bias_kernel(%arg0: i32, %arg1: memref<16x432xbf16, #tpu.memory_space<vmem>>, %arg2: memref<432x64xbf16, #tpu.memory_space<vmem>>, %arg3: memref<16x1xf32, #tpu.memory_space<vmem>>, %arg4: memref<16x64xf32, #tpu.memory_space<vmem>>) attributes {dimension_semantics = [#tpu.dimension_semantics<parallel>], iteration_bounds = array<i64: 1>, scalar_prefetch = 0 : i64, scratch_operands = 0 : i64, tpu.core_type = #tpu.core_type<tc>, window_params = [{pipeline_mode = #tpu.pipeline_mode<synchronous>, transform_indices = @transform_0, window_bounds = array<i64: 16, 432>}, {transform_indices = @transform_1, window_bounds = array<i64: 432, 64>}, {pipeline_mode = #tpu.pipeline_mode<synchronous>, transform_indices = @transform_2, window_bounds = array<i64: 16, 1>}, {transform_indices = @transform_3, window_bounds = array<i64: 16, 64>}]} {
    %c0 = arith.constant 0 : index
    %c0_0 = arith.constant 0 : index
    %0 = vector.load %arg1[%c0, %c0_0] : memref<16x432xbf16, #tpu.memory_space<vmem>>, vector<16x432xbf16>
    %c0_1 = arith.constant 0 : index
    %c0_2 = arith.constant 0 : index
    %1 = vector.load %arg2[%c0_1, %c0_2] : memref<432x64xbf16, #tpu.memory_space<vmem>>, vector<432x64xbf16>
    %cst = arith.constant dense<0.000000e+00> : vector<16x64xf32>
    %2 = tpu.matmul %0, %1, %cst {dimension_numbers = #tpu.dot_dimension_numbers<[1], [0], [0], [1], [0, 0, 1, 1], [], []>} : vector<16x432xbf16>, vector<432x64xbf16>, vector<16x64xf32> -> vector<16x64xf32>
    %c0_3 = arith.constant 0 : index
    %c0_4 = arith.constant 0 : index
    %3 = vector.load %arg3[%c0_3, %c0_4] : memref<16x1xf32, #tpu.memory_space<vmem>>, vector<16x1xf32>
    %4 = vector.broadcast %3 : vector<16x1xf32> to vector<16x64xf32>
    %5 = arith.addf %2, %4 : vector<16x64xf32>
    %cst_5 = arith.constant 0.000000e+00 : f32
    %6 = vector.broadcast %cst_5 : f32 to vector<16x64xf32>
    %7 = arith.maximumf %5, %6 : vector<16x64xf32>
    %c0_6 = arith.constant 0 : index
    %c0_7 = arith.constant 0 : index
    %8 = vector.load %arg4[%c0_6, %c0_7] : memref<16x64xf32, #tpu.memory_space<vmem>>, vector<16x64xf32>
    tpu.vector_store %arg4[%c0_6, %c0_7], %7 {strides = array<i32>} : memref<16x64xf32, #tpu.memory_space<vmem>>, vector<16x64xf32>,
    return
  }
  func.func @transform_0(%arg0: i32) -> (i32, i32) {
    %c0_i32 = arith.constant 0 : i32
    %c0_i32_0 = arith.constant 0 : i32
    %c0_i32_1 = arith.constant 0 : i32
    return %c0_i32, %c0_i32_0 : i32, i32
  }
  func.func @transform_1(%arg0: i32) -> (i32, i32) {
    %c0_i32 = arith.constant 0 : i32
    %c0_i32_0 = arith.constant 0 : i32
    return %c0_i32, %arg0 : i32, i32
  }
  func.func @transform_2(%arg0: i32) -> (i32, i32) {
    %c0_i32 = arith.constant 0 : i32
    %c0_i32_0 = arith.constant 0 : i32
    %c0_i32_1 = arith.constant 0 : i32
    return %c0_i32, %c0_i32_0 : i32, i32
  }
  func.func @transform_3(%arg0: i32) -> (i32, i32) {
    %c0_i32 = arith.constant 0 : i32
    %c0_i32_0 = arith.constant 0 : i32
    return %c0_i32, %arg0 : i32, i32
  }
}

module attributes {stable_mosaic.version = 11 : i64} {
  func.func @_gemm_bias_kernel(%arg0: i32, %arg1: memref<64x192xbf16, #tpu.memory_space<vmem>>, %arg2: memref<192x64xbf16, #tpu.memory_space<vmem>>, %arg3: memref<64x1xf32, #tpu.memory_space<vmem>>, %arg4: memref<64x64xf32, #tpu.memory_space<vmem>>) attributes {dimension_semantics = [#tpu.dimension_semantics<parallel>], iteration_bounds = array<i64: 1>, scalar_prefetch = 0 : i64, scratch_operands = 0 : i64, tpu.core_type = #tpu.core_type<tc>, window_params = [{pipeline_mode = #tpu.pipeline_mode<synchronous>, transform_indices = @transform_0, window_bounds = array<i64: 64, 192>}, {transform_indices = @transform_1, window_bounds = array<i64: 192, 64>}, {pipeline_mode = #tpu.pipeline_mode<synchronous>, transform_indices = @transform_2, window_bounds = array<i64: 64, 1>}, {transform_indices = @transform_3, window_bounds = array<i64: 64, 64>}]} {
    %c0 = arith.constant 0 : index
    %c0_0 = arith.constant 0 : index
    %0 = vector.load %arg1[%c0, %c0_0] : memref<64x192xbf16, #tpu.memory_space<vmem>>, vector<64x192xbf16>
    %c0_1 = arith.constant 0 : index
    %c0_2 = arith.constant 0 : index
    %1 = vector.load %arg2[%c0_1, %c0_2] : memref<192x64xbf16, #tpu.memory_space<vmem>>, vector<192x64xbf16>
    %cst = arith.constant dense<0.000000e+00> : vector<64x64xf32>
    %2 = tpu.matmul %0, %1, %cst {dimension_numbers = #tpu.dot_dimension_numbers<[1], [0], [0], [1], [0, 0, 1, 1], [], []>} : vector<64x192xbf16>, vector<192x64xbf16>, vector<64x64xf32> -> vector<64x64xf32>
    %c0_3 = arith.constant 0 : index
    %c0_4 = arith.constant 0 : index
    %3 = vector.load %arg3[%c0_3, %c0_4] : memref<64x1xf32, #tpu.memory_space<vmem>>, vector<64x1xf32>
    %4 = vector.broadcast %3 : vector<64x1xf32> to vector<64x64xf32>
    %5 = arith.addf %2, %4 : vector<64x64xf32>
    %cst_5 = arith.constant 0.000000e+00 : f32
    %6 = vector.broadcast %cst_5 : f32 to vector<64x64xf32>
    %7 = arith.maximumf %5, %6 : vector<64x64xf32>
    %c0_6 = arith.constant 0 : index
    %c0_7 = arith.constant 0 : index
    %8 = vector.load %arg4[%c0_6, %c0_7] : memref<64x64xf32, #tpu.memory_space<vmem>>, vector<64x64xf32>
    tpu.vector_store %arg4[%c0_6, %c0_7], %7 {strides = array<i32>} : memref<64x64xf32, #tpu.memory_space<vmem>>, vector<64x64xf32>,
    return
  }
  func.func @transform_0(%arg0: i32) -> (i32, i32) {
    %c0_i32 = arith.constant 0 : i32
    %c0_i32_0 = arith.constant 0 : i32
    %c0_i32_1 = arith.constant 0 : i32
    return %c0_i32, %c0_i32_0 : i32, i32
  }
  func.func @transform_1(%arg0: i32) -> (i32, i32) {
    %c0_i32 = arith.constant 0 : i32
    %c0_i32_0 = arith.constant 0 : i32
    return %c0_i32, %arg0 : i32, i32
  }
  func.func @transform_2(%arg0: i32) -> (i32, i32) {
    %c0_i32 = arith.constant 0 : i32
    %c0_i32_0 = arith.constant 0 : i32
    %c0_i32_1 = arith.constant 0 : i32
    return %c0_i32, %c0_i32_0 : i32, i32
  }
  func.func @transform_3(%arg0: i32) -> (i32, i32) {
    %c0_i32 = arith.constant 0 : i32
    %c0_i32_0 = arith.constant 0 : i32
    return %c0_i32, %arg0 : i32, i32
  }
}

module attributes {stable_mosaic.version = 11 : i64} {
  func.func @_gemm_bias_kernel(%arg0: i32, %arg1: memref<32x96xbf16, #tpu.memory_space<vmem>>, %arg2: memref<96x256xbf16, #tpu.memory_space<vmem>>, %arg3: memref<32x1xf32, #tpu.memory_space<vmem>>, %arg4: memref<32x256xf32, #tpu.memory_space<vmem>>) attributes {dimension_semantics = [#tpu.dimension_semantics<parallel>], iteration_bounds = array<i64: 2>, scalar_prefetch = 0 : i64, scratch_operands = 0 : i64, tpu.core_type = #tpu.core_type<tc>, window_params = [{pipeline_mode = #tpu.pipeline_mode<synchronous>, transform_indices = @transform_0, window_bounds = array<i64: 32, 96>}, {transform_indices = @transform_1, window_bounds = array<i64: 96, 256>}, {pipeline_mode = #tpu.pipeline_mode<synchronous>, transform_indices = @transform_2, window_bounds = array<i64: 32, 1>}, {transform_indices = @transform_3, window_bounds = array<i64: 32, 256>}]} {
    %c0 = arith.constant 0 : index
    %c0_0 = arith.constant 0 : index
    %0 = vector.load %arg1[%c0, %c0_0] : memref<32x96xbf16, #tpu.memory_space<vmem>>, vector<32x96xbf16>
    %c0_1 = arith.constant 0 : index
    %c0_2 = arith.constant 0 : index
    %1 = vector.load %arg2[%c0_1, %c0_2] : memref<96x256xbf16, #tpu.memory_space<vmem>>, vector<96x256xbf16>
    %cst = arith.constant dense<0.000000e+00> : vector<32x256xf32>
    %2 = tpu.matmul %0, %1, %cst {dimension_numbers = #tpu.dot_dimension_numbers<[1], [0], [0], [1], [0, 0, 1, 1], [], []>} : vector<32x96xbf16>, vector<96x256xbf16>, vector<32x256xf32> -> vector<32x256xf32>
    %c0_3 = arith.constant 0 : index
    %c0_4 = arith.constant 0 : index
    %3 = vector.load %arg3[%c0_3, %c0_4] : memref<32x1xf32, #tpu.memory_space<vmem>>, vector<32x1xf32>
    %4 = vector.broadcast %3 : vector<32x1xf32> to vector<32x256xf32>
    %5 = arith.addf %2, %4 : vector<32x256xf32>
    %cst_5 = arith.constant 0.000000e+00 : f32
    %6 = vector.broadcast %cst_5 : f32 to vector<32x256xf32>
    %7 = arith.maximumf %5, %6 : vector<32x256xf32>
    %c0_6 = arith.constant 0 : index
    %c0_7 = arith.constant 0 : index
    %8 = vector.load %arg4[%c0_6, %c0_7] : memref<32x256xf32, #tpu.memory_space<vmem>>, vector<32x256xf32>
    tpu.vector_store %arg4[%c0_6, %c0_7], %7 {strides = array<i32>} : memref<32x256xf32, #tpu.memory_space<vmem>>, vector<32x256xf32>,
    return
  }
  func.func @transform_0(%arg0: i32) -> (i32, i32) {
    %c0_i32 = arith.constant 0 : i32
    %c0_i32_0 = arith.constant 0 : i32
    %c0_i32_1 = arith.constant 0 : i32
    return %c0_i32, %c0_i32_0 : i32, i32
  }
  func.func @transform_1(%arg0: i32) -> (i32, i32) {
    %c0_i32 = arith.constant 0 : i32
    %c0_i32_0 = arith.constant 0 : i32
    return %c0_i32, %arg0 : i32, i32
  }
  func.func @transform_2(%arg0: i32) -> (i32, i32) {
    %c0_i32 = arith.constant 0 : i32
    %c0_i32_0 = arith.constant 0 : i32
    %c0_i32_1 = arith.constant 0 : i32
    return %c0_i32, %c0_i32_0 : i32, i32
  }
  func.func @transform_3(%arg0: i32) -> (i32, i32) {
    %c0_i32 = arith.constant 0 : i32
    %c0_i32_0 = arith.constant 0 : i32
    return %c0_i32, %arg0 : i32, i32
  }
}

</mosaic_0001>

<llo_original>
// kernel: hourglass_forward.6
$region0: #{hourglass_forward.6}
  #allocation0 [shape = 'u32[]', space=smem, size = 0x4, offset = 0x4, fixed_abs, tag = 'smem constant byte address 0x4 - core index']
  #allocation1 [shape = 'u32[144,128]{1,0:T(1,128)}', space=vmem, size = 0x12000, scoped, tag = 'internal scratch']
  %s0 = inlined_call_operand.vmem [shape: bf16[8,108], index: 0, kind: input, shape index: {}]
  %s1 = inlined_call_operand.vmem [shape: bf16[108,512], index: 1, kind: input, shape index: {}]
  %s2 = inlined_call_operand.vmem [shape: f32[8,1], index: 2, kind: input, shape index: {}]
  %s3 = inlined_call_operand.vmem [shape: f32[8,512], index: 3, kind: output, shape index: {}]
  %s4 = sld [smem:[#allocation0]]
  $region83: #{hourglass_forward.6} parent=0
    _
  %s6 = ssub.s32 1, %s4
  %s7 = scalar_select 0, %s6, %s4
  $region1: #{hourglass_forward.6} parent=0
    #allocation2 [shape = 'u8[114688]{0}', space=vmem, size = 0x1c000, scoped, tag = 'input window, operand 1']
    loop: start=0, step=1, limit=4
    $region2: #{hourglass_forward.6} parent=1 // loop_pre_header
      _
    $region3: #{hourglass_forward.6} parent=1 // loop_header
      %s9 = sphi 0, %s13
      %p10 = scmp.ge.s32.totalorder %s9, 4
      %s17 = sphi 0, %s17
      %s19 = sphi 0, %s17
      %s20 = sphi 0, %s19
      %s34 = sphi 0, %s20
      %s40 = sphi 0, %s42
      %s43 = sphi 0, %s40
      %s44 = sphi 0, %s43
      %s60 = sphi 0, %s44
      %s64 = sphi 0, %s64
      %s66 = sphi 0, %s64
      %s67 = sphi 0, %s66
      %s81 = sphi 0, %s67
      %s87 = sphi 0, %s89
      %s90 = sphi 0, %s87
      %s91 = sphi 0, %s90
      %s107 = sphi 0, %s91
    $region4: #{hourglass_forward.6} parent=1 // loop_header_branch
      %12 = sbr.rel (%p10) target = $region8
    $region5: #{hourglass_forward.6} parent=1 // loop_body
      %s14 = ssub.s32 %s9, 1
      %s15 = ssub.s32 %s9, 2
      %s16 = sadd.s32 %s9, 1
      %s18 = sadd.s32 %s17, 1
      %p21 = scmp.eq.s32.totalorder %s9, 1
      %p22 = scmp.ne.s32.totalorder %s17, %s19
      %p23 = scmp.eq.s32.totalorder %s9, 0
      %p24 = por %p22, %p23
      %p25 = scmp.ne.s32.totalorder %s17, %s19
      %p26 = scmp.eq.s32.totalorder %s14, 1
      %p27 = por %p25, %p26
      %p28 = scmp.ne.s32.totalorder %s19, %s20
      %p29 = scmp.eq.s32.totalorder %s14, 0
      %p30 = por %p28, %p29
      %p31 = scmp.ne.s32.totalorder %s19, %s20
      %p32 = scmp.eq.s32.totalorder %s15, 1
      %p33 = por %p31, %p32
      %p35 = scmp.ne.s32.totalorder %s20, %s34
      %p36 = scmp.eq.s32.totalorder %s15, 0
      %p37 = por %p35, %p36
      %s38 = ssub.s32 %s9, %s16
      %p39 = scmp.eq.s32.totalorder %s38, 0
      %s41 = sadd.s32 %s40, 1
      %s42 = scalar_select %p39, %s40, %s41
      %p45 = pneg %p39
      %p46 = scmp.eq.s32.totalorder %s9, 1
      %p47 = por %p45, %p46
      %p48 = scmp.ne.s32.totalorder %s40, %s43
      %p49 = scmp.eq.s32.totalorder %s9, 0
      %p50 = por %p48, %p49
      %p51 = scmp.ne.s32.totalorder %s40, %s43
      %p52 = scmp.eq.s32.totalorder %s14, 1
      %p53 = por %p51, %p52
      %p54 = scmp.ne.s32.totalorder %s43, %s44
      %p55 = scmp.eq.s32.totalorder %s14, 0
      %p56 = por %p54, %p55
      %p57 = scmp.ne.s32.totalorder %s43, %s44
      %p58 = scmp.eq.s32.totalorder %s15, 1
      %p59 = por %p57, %p58
      %p61 = scmp.ne.s32.totalorder %s44, %s60
      %p62 = scmp.eq.s32.totalorder %s15, 0
      %p63 = por %p61, %p62
      %s65 = sadd.s32 %s64, 1
      %p68 = scmp.eq.s32.totalorder %s9, 1
      %p69 = scmp.ne.s32.totalorder %s64, %s66
      %p70 = scmp.eq.s32.totalorder %s9, 0
      %p71 = por %p69, %p70
      %p72 = scmp.ne.s32.totalorder %s64, %s66
      %p73 = scmp.eq.s32.totalorder %s14, 1
      %p74 = por %p72, %p73
      %p75 = scmp.ne.s32.totalorder %s66, %s67
      %p76 = scmp.eq.s32.totalorder %s14, 0
      %p77 = por %p75, %p76
      %p78 = scmp.ne.s32.totalorder %s66, %s67
      %p79 = scmp.eq.s32.totalorder %s15, 1
      %p80 = por %p78, %p79
      %p82 = scmp.ne.s32.totalorder %s67, %s81
      %p83 = scmp.eq.s32.totalorder %s15, 0
      %p84 = por %p82, %p83
      %s85 = ssub.s32 %s9, %s16
      %p86 = scmp.eq.s32.totalorder %s85, 0
      %s88 = sadd.s32 %s87, 1
      %s89 = scalar_select %p86, %s87, %s88
      %p92 = pneg %p86
      %p93 = scmp.eq.s32.totalorder %s9, 1
      %p94 = por %p92, %p93
      %p95 = scmp.ne.s32.totalorder %s87, %s90
      %p96 = scmp.eq.s32.totalorder %s9, 0
      %p97 = por %p95, %p96
      %p98 = scmp.ne.s32.totalorder %s87, %s90
      %p99 = scmp.eq.s32.totalorder %s14, 1
      %p100 = por %p98, %p99
      %p101 = scmp.ne.s32.totalorder %s90, %s91
      %p102 = scmp.eq.s32.totalorder %s14, 0
      %p103 = por %p101, %p102
      %p104 = scmp.ne.s32.totalorder %s90, %s91
      %p105 = scmp.eq.s32.totalorder %s15, 1
      %p106 = por %p104, %p105
      %p108 = scmp.ne.s32.totalorder %s91, %s107
      %p109 = scmp.eq.s32.totalorder %s15, 0
      %p110 = por %p108, %p109
      %p111 = scmp.le.s32.totalorder 1, %s9
      %p112 = scmp.lt.s32.totalorder %s9, 3
      %p113 = pnand %p111, %p112
      %p114 = pneg %p113
      // Predicated region
      $region9: #{hourglass_forward.6} parent=5 // pred_check
        _
      $region10: #{hourglass_forward.6} parent=5 // pred_check_branch
        %116 = sbr.rel (%p113) target = $region12
      $region11: #{hourglass_forward.6} parent=5 // pred_region
        %s117 = ssub.s32 %s9, 1
        // Predicated region
        $region13: #{hourglass_forward.6} parent=11 // pred_check
          %p118 = pneg %p30
        $region14: #{hourglass_forward.6} parent=11 // pred_check_branch
          %120 = sbr.rel (%p118) target = $region16
        $region15: #{hourglass_forward.6} parent=11 // pred_region
          _
        $region16: #{hourglass_forward.6} parent=11 // pred_fallthru
          _
        // Predicated region
        $region17: #{hourglass_forward.6} parent=11 // pred_check
          %p121 = pneg %p77
        $region18: #{hourglass_forward.6} parent=11 // pred_check_branch
          %123 = sbr.rel (%p121) target = $region20
        $region19: #{hourglass_forward.6} parent=11 // pred_region
          _
        $region20: #{hourglass_forward.6} parent=11 // pred_fallthru
          _
      $region12: #{hourglass_forward.6} parent=5 // pred_fallthru
        _
      %p124 = scmp.lt.s32.totalorder %s9, 2
      // Predicated region
      $region21: #{hourglass_forward.6} parent=5 // pred_check
        %p125 = pneg %p124
      $region22: #{hourglass_forward.6} parent=5 // pred_check_branch
        %127 = sbr.rel (%p125) target = $region24
      $region23: #{hourglass_forward.6} parent=5 // pred_region
        // Predicated region
        $region25: #{hourglass_forward.6} parent=23 // pred_check
          %p128 = pneg %p50
        $region26: #{hourglass_forward.6} parent=23 // pred_check_branch
          %130 = sbr.rel (%p128) target = $region28
        $region27: #{hourglass_forward.6} parent=23 // pred_region
          %s131 = sand.u32 %s40, 1
          %s132 = sand.u32 %s40, 1
          %s133 = smul.addr %s132, 112
          %s134 = scalar_lea.vmem [#allocation2], %s133
          %s135 = smul.u32 2, %s9
          %s136 = smul.addr %s135, 4
          %s137 = scalar_lea.vmem %s1, %s136
          // Predicated region
          $region29: #{hourglass_forward.6} parent=27 // pred_check
            _
          $region30: #{hourglass_forward.6} parent=27 // pred_check_branch
            %139 = sbr.rel (0) target = $region32
          $region31: #{hourglass_forward.6} parent=27 // pred_region
            // Predicated region
            $region33: #{hourglass_forward.6} parent=31 // pred_check
              _
            $region34: #{hourglass_forward.6} parent=31 // pred_check_branch
              %141 = sbr.rel (0) target = $region36
            $region35: #{hourglass_forward.6} parent=31 // pred_region
              // Predicated region
              $region48: #{hourglass_forward.6} parent=35 // pred_check
                _
              $region49: #{hourglass_forward.6} parent=35 // pred_check_branch
                %183 = sbr.rel (0) target = $region51
              $region50: #{hourglass_forward.6} parent=35 // pred_region
                loop: start=0, step=1, limit=1
                $region52: #{hourglass_forward.6} parent=50 // loop_pre_header
                  _
                $region53: #{hourglass_forward.6} parent=50 // loop_header
                  %s185 = sphi 0, %s189
                  %p186 = scmp.ge.s32.totalorder %s185, 1
                  %s190 = sphi %s137, %s137
                  %s191 = sphi %s134, %s134
                $region54: #{hourglass_forward.6} parent=50 // loop_header_branch
                  %188 = sbr.rel (%p186) target = $region58
                $region55: #{hourglass_forward.6} parent=50 // loop_body
                  %v192 = vld [vmem:[%s190] sm:$0xff]
                  %193 = vst [vmem:[%s191] sm:$0xff] %v192
                  %v194 = vld [vmem:[%s190 + $0x10] sm:$0xff]
                  %195 = vst [vmem:[%s191 + $0x8] sm:$0xff] %v194
                  %v196 = vld [vmem:[%s190 + $0x20] sm:$0xff]
                  %197 = vst [vmem:[%s191 + $0x10] sm:$0xff] %v196
                  %v198 = vld [vmem:[%s190 + $0x30] sm:$0xff]
                  %199 = vst [vmem:[%s191 + $0x18] sm:$0xff] %v198
                  %v200 = vld [vmem:[%s190 + $0x40] sm:$0xff]
                  %201 = vst [vmem:[%s191 + $0x20] sm:$0xff] %v200
                  %v202 = vld [vmem:[%s190 + $0x50] sm:$0xff]
                  %203 = vst [vmem:[%s191 + $0x28] sm:$0xff] %v202
                  %v204 = vld [vmem:[%s190 + $0x60] sm:$0xff]
                  %205 = vst [vmem:[%s191 + $0x30] sm:$0xff] %v204
                  %v206 = vld [vmem:[%s190 + $0x70] sm:$0xff]
                  %207 = vst [vmem:[%s191 + $0x38] sm:$0xff] %v206
                  %v208 = vld [vmem:[%s190 + $0x80] sm:$0xff]
                  %209 = vst [vmem:[%s191 + $0x40] sm:$0xff] %v208
                  %v210 = vld [vmem:[%s190 + $0x90] sm:$0xff]
                  %211 = vst [vmem:[%s191 + $0x48] sm:$0xff] %v210
                  %v212 = vld [vmem:[%s190 + $0xa0] sm:$0xff]
                  %213 = vst [vmem:[%s191 + $0x50] sm:$0xff] %v212
                  %v214 = vld [vmem:[%s190 + $0xb0] sm:$0xff]
                  %215 = vst [vmem:[%s191 + $0x58] sm:$0xff] %v214
                  %v216 = vld [vmem:[%s190 + $0xc0] sm:$0xff]
                  %217 = vst [vmem:[%s191 + $0x60] sm:$0xff] %v216
                  %v218 = vld [vmem:[%s190 + $0xd0] sm:$0xff]
                  %219 = vst [vmem:[%s191 + $0x68] sm:$0xff] %v218
                $region56: #{hourglass_forward.6} parent=50 // loop_footer
                  %s189 = sadd.s32 1, %s185
                $region57: #{hourglass_forward.6} parent=50 // loop_footer_branch
                  %184 = sbr.rel target = $region53
                $region58: #{hourglass_forward.6} parent=50 // loop_exit
                  _
              $region51: #{hourglass_forward.6} parent=35 // pred_fallthru
                _
              // Predicated region
              $region59: #{hourglass_forward.6} parent=35 // pred_check
                _
              $region60: #{hourglass_forward.6} parent=35 // pred_check_branch
                %221 = sbr.rel target = $region62
              $region61: #{hourglass_forward.6} parent=35 // pred_region
                _
              $region62: #{hourglass_forward.6} parent=35 // pred_fallthru
                _
            $region36: #{hourglass_forward.6} parent=31 // pred_fallthru
              _
            // Predicated region
            $region37: #{hourglass_forward.6} parent=31 // pred_check
              _
            $region38: #{hourglass_forward.6} parent=31 // pred_check_branch
              %143 = sbr.rel target = $region40
            $region39: #{hourglass_forward.6} parent=31 // pred_region
              %s145 = ssub.s32 256, 1
              loop: start=0, step=1, limit=1
              $region41: #{hourglass_forward.6} parent=39 // loop_pre_header
                _
              $region42: #{hourglass_forward.6} parent=39 // loop_header
                %s147 = sphi 0, %s151
                %p148 = scmp.ge.s32.totalorder %s147, 1
                %s152 = sphi %s137, %s137
                %s153 = sphi %s134, %s134
              $region43: #{hourglass_forward.6} parent=39 // loop_header_branch
                %150 = sbr.rel (%p148) target = $region47
              $region44: #{hourglass_forward.6} parent=39 // loop_body
                %v154 = vld [vmem:[%s152] sm:%s145]
                %155 = vst [vmem:[%s153] sm:%s145] %v154
                %v156 = vld [vmem:[%s152 + $0x10] sm:%s145]
                %157 = vst [vmem:[%s153 + $0x8] sm:%s145] %v156
                %v158 = vld [vmem:[%s152 + $0x20] sm:%s145]
                %159 = vst [vmem:[%s153 + $0x10] sm:%s145] %v158
                %v160 = vld [vmem:[%s152 + $0x30] sm:%s145]
                %161 = vst [vmem:[%s153 + $0x18] sm:%s145] %v160
                %v162 = vld [vmem:[%s152 + $0x40] sm:%s145]
                %163 = vst [vmem:[%s153 + $0x20] sm:%s145] %v162
                %v164 = vld [vmem:[%s152 + $0x50] sm:%s145]
                %165 = vst [vmem:[%s153 + $0x28] sm:%s145] %v164
                %v166 = vld [vmem:[%s152 + $0x60] sm:%s145]
                %167 = vst [vmem:[%s153 + $0x30] sm:%s145] %v166
                %v168 = vld [vmem:[%s152 + $0x70] sm:%s145]
                %169 = vst [vmem:[%s153 + $0x38] sm:%s145] %v168
                %v170 = vld [vmem:[%s152 + $0x80] sm:%s145]
                %171 = vst [vmem:[%s153 + $0x40] sm:%s145] %v170
                %v172 = vld [vmem:[%s152 + $0x90] sm:%s145]
                %173 = vst [vmem:[%s153 + $0x48] sm:%s145] %v172
                %v174 = vld [vmem:[%s152 + $0xa0] sm:%s145]
                %175 = vst [vmem:[%s153 + $0x50] sm:%s145] %v174
                %v176 = vld [vmem:[%s152 + $0xb0] sm:%s145]
                %177 = vst [vmem:[%s153 + $0x58] sm:%s145] %v176
                %v178 = vld [vmem:[%s152 + $0xc0] sm:%s145]
                %179 = vst [vmem:[%s153 + $0x60] sm:%s145] %v178
                %v180 = vld [vmem:[%s152 + $0xd0] sm:%s145]
                %181 = vst [vmem:[%s153 + $0x68] sm:%s145] %v180
              $region45: #{hourglass_forward.6} parent=39 // loop_footer
                %s151 = sadd.s32 1, %s147
              $region46: #{hourglass_forward.6} parent=39 // loop_footer_branch
                %146 = sbr.rel target = $region42
              $region47: #{hourglass_forward.6} parent=39 // loop_exit
                _
            $region40: #{hourglass_forward.6} parent=31 // pred_fallthru
              _
          $region32: #{hourglass_forward.6} parent=27 // pred_fallthru
            _
          %222 = vnop
        $region28: #{hourglass_forward.6} parent=23 // pred_fallthru
          _
      $region24: #{hourglass_forward.6} parent=5 // pred_fallthru
        _
      %p223 = scmp.le.s32.totalorder 1, %s9
      %p224 = scmp.lt.s32.totalorder %s9, 3
      %p225 = pnand %p223, %p224
      %p226 = pneg %p225
      // Predicated region
      $region63: #{hourglass_forward.6} parent=5 // pred_check
        _
      $region64: #{hourglass_forward.6} parent=5 // pred_check_branch
        %228 = sbr.rel (%p225) target = $region66
      $region65: #{hourglass_forward.6} parent=5 // pred_region
        %s229 = ssub.s32 %s9, 1
        %s230 = sand.u32 %s43, 1
        %s231 = sand.u32 %s43, 1
        %s232 = smul.addr %s231, 112
        %s233 = scalar_lea.vmem [#allocation2], %s232
        // Predicated region
        $region67: #{hourglass_forward.6} parent=65 // pred_check
          %p234 = pneg %p56
        $region68: #{hourglass_forward.6} parent=65 // pred_check_branch
          %236 = sbr.rel (%p234) target = $region70
        $region69: #{hourglass_forward.6} parent=65 // pred_region
          _
        $region70: #{hourglass_forward.6} parent=65 // pred_fallthru
          _
        %p237 = pneg %p30
        %p238 = pneg %p27
        %s239 = sand.u32 %s43, 1
        %s240 = sand.u32 %s43, 1
        %s241 = smul.addr %s240, 112
        %s242 = scalar_lea.vmem [#allocation2], %s241
        %p243 = pneg %p56
        %p244 = pneg %p53
        %p245 = pneg %p77
        %p246 = pneg %p74
        %p247 = pneg %p103
        %p248 = pneg %p100
        %s249 = smul.u32 2, %s14
        %p250 = scmp.lt.s32.totalorder %s249, 3
        %s251 = scalar_select %p250, %s249, 3
        %s252 = smul.addr %s251, 8
        %s253 = scalar_lea.vmem %s3, %s252
        %s254 = smul.u32 2, %s14
        %s255 = smul.u32 2, %s14
        %p256 = scmp.lt.s32.totalorder %s255, 3
        %s257 = scalar_select %p256, %s255, 3
        %s258 = smul.addr %s257, 8
        %s259 = scalar_lea.vmem %s3, %s258
        %s260 = smul.u32 2, %s14
        %v262 = vld [vmem:[%s0] sm:$0xf]
        %v263 = vld [vmem:[%s233] sm:$0xff]
        %v264 = vld [vmem:[%s233 + $0x8] sm:$0xff]
        %v265 = vld [vmem:[%s233 + $0x10] sm:$0xff]
        %v266 = vld [vmem:[%s233 + $0x18] sm:$0xff]
        %v267 = vld [vmem:[%s233 + $0x20] sm:$0xff]
        %v268 = vld [vmem:[%s233 + $0x28] sm:$0xff]
        %v269 = vld [vmem:[%s233 + $0x30] sm:$0xff]
        %v270 = vld [vmem:[%s233 + $0x38] sm:$0xff]
        %v271 = vld [vmem:[%s233 + $0x40] sm:$0xff]
        %v272 = vld [vmem:[%s233 + $0x48] sm:$0xff]
        %v273 = vld [vmem:[%s233 + $0x50] sm:$0xff]
        %v274 = vld [vmem:[%s233 + $0x58] sm:$0xff]
        %v275 = vld [vmem:[%s233 + $0x60] sm:$0xff]
        %v276 = vld [vmem:[%s233 + $0x68] sm:$0x33]
        %v277 = vld [vmem:[%s2] sm:$0xff]
        %279 = vset.pattern.permute.xlu0 0
        %280 = vperm.xlu0 %279, %v277
        %v281 = vpop.permute.xlu0 %280
        %v297 = vunpack.c.l.b16 %v263
        %v298 = vunpack.c.h.b16 %v263
        %v299 = vunpack.c.l.b16 %v264
        %v300 = vunpack.c.h.b16 %v264
        %v301 = vunpack.c.l.b16 %v265
        %v302 = vunpack.c.h.b16 %v265
        %v303 = vunpack.c.l.b16 %v266
        %v304 = vunpack.c.h.b16 %v266
        %v305 = vunpack.c.l.b16 %v267
        %v306 = vunpack.c.h.b16 %v267
        %v307 = vunpack.c.l.b16 %v268
        %v308 = vunpack.c.h.b16 %v268
        %v309 = vunpack.c.l.b16 %v269
        %v310 = vunpack.c.h.b16 %v269
        %v311 = vunpack.c.l.b16 %v270
        %v312 = vunpack.c.h.b16 %v270
        %v313 = vunpack.c.l.b16 %v271
        %v314 = vunpack.c.h.b16 %v271
        %v315 = vunpack.c.l.b16 %v272
        %v316 = vunpack.c.h.b16 %v272
        %v317 = vunpack.c.l.b16 %v273
        %v318 = vunpack.c.h.b16 %v273
        %v319 = vunpack.c.l.b16 %v274
        %v320 = vunpack.c.h.b16 %v274
        %v321 = vunpack.c.l.b16 %v275
        %v322 = vunpack.c.h.b16 %v275
        %v323 = vunpack.c.l.b16 %v276
        %v324 = vunpack.c.h.b16 %v276
        %v325 = vpack.c.b16 %v299, %v297
        %v326 = vpack.c.b16 %v300, %v298
        %v327 = vpack.c.b16 %v303, %v301
        %v328 = vpack.c.b16 %v304, %v302
        %v329 = vpack.c.b16 %v307, %v305
        %v330 = vpack.c.b16 %v308, %v306
        %v331 = vpack.c.b16 %v311, %v309
        %v332 = vpack.c.b16 %v312, %v310
        %v333 = vpack.c.b16 %v315, %v313
        %v334 = vpack.c.b16 %v316, %v314
        %v335 = vpack.c.b16 %v319, %v317
        %v336 = vpack.c.b16 %v320, %v318
        %v337 = vpack.c.b16 %v323, %v321
        %v338 = vpack.c.b16 %v324, %v322
        %vm351 = vcmask 883712
        %v353 = vsel %vm351, %v262, 0
        %vm355 = vcmask 1045504
        %v357 = vsel %vm355, %v337, 0
        %v360 = vsel %vm355, %v338, 0
        %362 = vmatprep.subr.bf16.mxu0 0
        %363 = vmatpush1.bf16.msra.mxu0 0
        %364 = vmatprep.subr.bf16.mxu0 %v360
        %365 = vmatpush1.bf16.msra.mxu0 %v357
        %366 = vmatprep.subr.bf16.mxu0 %v336
        %367 = vmatpush1.bf16.msra.mxu0 %v335
        %368 = vmatprep.subr.bf16.mxu0 %v334
        %369 = vmatpush1.bf16.msra.mxu0 %v333
        %370 = vmatprep.subr.bf16.mxu0 %v332
        %371 = vmatpush1.bf16.msra.mxu0 %v331
        %372 = vmatprep.subr.bf16.mxu0 %v330
        %373 = vmatpush1.bf16.msra.mxu0 %v329
        %374 = vmatprep.subr.bf16.mxu0 %v328
        %375 = vmatpush1.bf16.msra.mxu0 %v327
        %376 = vmatprep.subr.bf16.mxu0 %v326
        %377 = vmatpush1.bf16.msra.mxu0 %v325
        %378 = vmatprep.subr.bf16.mxu0 0
        %379 = vmatpush2.bf16.msra.mxu0 0
        %380 = vmatprep.subr.bf16.mxu0 0
        %381 = vmatpush2.bf16.msra.mxu0 0
        %382 = vmatprep.subr.bf16.mxu0 0
        %383 = vmatpush2.bf16.msra.mxu0 0
        %384 = vmatprep.subr.bf16.mxu0 0
        %385 = vmatpush2.bf16.msra.mxu0 0
        %386 = vmatprep.subr.bf16.mxu0 0
        %387 = vmatpush2.bf16.msra.mxu0 0
        %388 = vmatprep.subr.bf16.mxu0 0
        %389 = vmatpush2.bf16.msra.mxu0 0
        %390 = vmatprep.subr.bf16.mxu0 0
        %391 = vmatpush2.bf16.msra.mxu0 0
        %392 = vmatprep.subr.bf16.mxu0 0
        %393 = vmatpush2.bf16.msra.mxu0 0
        %394 = vmatprep.mubr.bf16.mxu0 0
        %395 = vmatmul.mubr.bf16.gmra.mxu0 %v353
        %v396 = vpop.f32.mrf.mxu0
        %v397 = vadd.f32 %v281, %v396
        %v398 = vpop.f32.mrf.mxu0
        %v399 = vadd.f32 %v281, %v398
        %v400 = vpop.f32.mrf.mxu0
        %v401 = vpop.f32.mrf.mxu0
        %402 = vdwg.mxu0
        %v403 = vmax.f32 %v397, 0.0
        %v404 = vmax.f32 %v399, 0.0
        %405 = vst [vmem:[%s259] sm:$0xff] %v403
        %406 = vst [vmem:[%s259 + $0x8] sm:$0xff] %v404
        %s407 = smul.u32 2, %s14
        %p408 = scmp.lt.s32.totalorder %s407, 3
        %s409 = scalar_select %p408, %s407, 3
        %s410 = smul.addr %s409, 8
        %s411 = scalar_lea.vmem %s3, %s410
        // Predicated region
        $region71: #{hourglass_forward.6} parent=65 // pred_check
          %p412 = pneg %p100
        $region72: #{hourglass_forward.6} parent=65 // pred_check_branch
          %414 = sbr.rel (%p412) target = $region74
        $region73: #{hourglass_forward.6} parent=65 // pred_region
          %s415 = smul.u32 2, %s14
        $region74: #{hourglass_forward.6} parent=65 // pred_fallthru
          _
      $region66: #{hourglass_forward.6} parent=5 // pred_fallthru
        _
      %p416 = scmp.le.s32.totalorder 2, %s9
      // Predicated region
      $region75: #{hourglass_forward.6} parent=5 // pred_check
        %p417 = pneg %p416
      $region76: #{hourglass_forward.6} parent=5 // pred_check_branch
        %419 = sbr.rel (%p417) target = $region78
      $region77: #{hourglass_forward.6} parent=5 // pred_region
        %s420 = ssub.s32 %s9, 2
        // Predicated region
        $region79: #{hourglass_forward.6} parent=77 // pred_check
          %p421 = pneg %p106
        $region80: #{hourglass_forward.6} parent=77 // pred_check_branch
          %423 = sbr.rel (%p421) target = $region82
        $region81: #{hourglass_forward.6} parent=77 // pred_region
          %s424 = smul.u32 2, %s15
          %p425 = scmp.lt.s32.totalorder %s424, 3
          %s426 = scalar_select %p425, %s424, 3
          %s427 = smul.addr %s426, 8
          %s428 = scalar_lea.vmem %s3, %s427
        $region82: #{hourglass_forward.6} parent=77 // pred_fallthru
          _
      $region78: #{hourglass_forward.6} parent=5 // pred_fallthru
        _
    $region6: #{hourglass_forward.6} parent=1 // loop_footer
      %s13 = sadd.s32 1, %s9
    $region7: #{hourglass_forward.6} parent=1 // loop_footer_branch
      %8 = sbr.rel target = $region3
    $region8: #{hourglass_forward.6} parent=1 // loop_exit
      _

// kernel: hourglass_forward.7
$region0: #{hourglass_forward.7}
  #allocation0 [shape = 'u32[]', space=smem, size = 0x4, offset = 0x4, fixed_abs, tag = 'smem constant byte address 0x4 - core index']
  #allocation1 [shape = 'u32[144,128]{1,0:T(1,128)}', space=vmem, size = 0x12000, scoped, tag = 'internal scratch']
  %s0 = inlined_call_operand.vmem [shape: bf16[8,216], index: 0, kind: input, shape index: {}]
  %s1 = inlined_call_operand.vmem [shape: bf16[216,512], index: 1, kind: input, shape index: {}]
  %s2 = inlined_call_operand.vmem [shape: f32[8,1], index: 2, kind: input, shape index: {}]
  %s3 = inlined_call_operand.vmem [shape: f32[8,512], index: 3, kind: output, shape index: {}]
  %s4 = sld [smem:[#allocation0]]
  $region83: #{hourglass_forward.7} parent=0
    _
  %s6 = ssub.s32 1, %s4
  %s7 = scalar_select 0, %s6, %s4
  $region1: #{hourglass_forward.7} parent=0
    #allocation2 [shape = 'u8[221184]{0}', space=vmem, size = 0x36000, scoped, tag = 'input window, operand 1']
    loop: start=0, step=1, limit=4
    $region2: #{hourglass_forward.7} parent=1 // loop_pre_header
      _
    $region3: #{hourglass_forward.7} parent=1 // loop_header
      %s9 = sphi 0, %s13
      %p10 = scmp.ge.s32.totalorder %s9, 4
      %s17 = sphi 0, %s17
      %s19 = sphi 0, %s17
      %s20 = sphi 0, %s19
      %s34 = sphi 0, %s20
      %s40 = sphi 0, %s42
      %s43 = sphi 0, %s40
      %s44 = sphi 0, %s43
      %s60 = sphi 0, %s44
      %s64 = sphi 0, %s64
      %s66 = sphi 0, %s64
      %s67 = sphi 0, %s66
      %s81 = sphi 0, %s67
      %s87 = sphi 0, %s89
      %s90 = sphi 0, %s87
      %s91 = sphi 0, %s90
      %s107 = sphi 0, %s91
    $region4: #{hourglass_forward.7} parent=1 // loop_header_branch
      %12 = sbr.rel (%p10) target = $region8
    $region5: #{hourglass_forward.7} parent=1 // loop_body
      %s14 = ssub.s32 %s9, 1
      %s15 = ssub.s32 %s9, 2
      %s16 = sadd.s32 %s9, 1
      %s18 = sadd.s32 %s17, 1
      %p21 = scmp.eq.s32.totalorder %s9, 1
      %p22 = scmp.ne.s32.totalorder %s17, %s19
      %p23 = scmp.eq.s32.totalorder %s9, 0
      %p24 = por %p22, %p23
      %p25 = scmp.ne.s32.totalorder %s17, %s19
      %p26 = scmp.eq.s32.totalorder %s14, 1
      %p27 = por %p25, %p26
      %p28 = scmp.ne.s32.totalorder %s19, %s20
      %p29 = scmp.eq.s32.totalorder %s14, 0
      %p30 = por %p28, %p29
      %p31 = scmp.ne.s32.totalorder %s19, %s20
      %p32 = scmp.eq.s32.totalorder %s15, 1
      %p33 = por %p31, %p32
      %p35 = scmp.ne.s32.totalorder %s20, %s34
      %p36 = scmp.eq.s32.totalorder %s15, 0
      %p37 = por %p35, %p36
      %s38 = ssub.s32 %s9, %s16
      %p39 = scmp.eq.s32.totalorder %s38, 0
      %s41 = sadd.s32 %s40, 1
      %s42 = scalar_select %p39, %s40, %s41
      %p45 = pneg %p39
      %p46 = scmp.eq.s32.totalorder %s9, 1
      %p47 = por %p45, %p46
      %p48 = scmp.ne.s32.totalorder %s40, %s43
      %p49 = scmp.eq.s32.totalorder %s9, 0
      %p50 = por %p48, %p49
      %p51 = scmp.ne.s32.totalorder %s40, %s43
      %p52 = scmp.eq.s32.totalorder %s14, 1
      %p53 = por %p51, %p52
      %p54 = scmp.ne.s32.totalorder %s43, %s44
      %p55 = scmp.eq.s32.totalorder %s14, 0
      %p56 = por %p54, %p55
      %p57 = scmp.ne.s32.totalorder %s43, %s44
      %p58 = scmp.eq.s32.totalorder %s15, 1
      %p59 = por %p57, %p58
      %p61 = scmp.ne.s32.totalorder %s44, %s60
      %p62 = scmp.eq.s32.totalorder %s15, 0
      %p63 = por %p61, %p62
      %s65 = sadd.s32 %s64, 1
      %p68 = scmp.eq.s32.totalorder %s9, 1
      %p69 = scmp.ne.s32.totalorder %s64, %s66
      %p70 = scmp.eq.s32.totalorder %s9, 0
      %p71 = por %p69, %p70
      %p72 = scmp.ne.s32.totalorder %s64, %s66
      %p73 = scmp.eq.s32.totalorder %s14, 1
      %p74 = por %p72, %p73
      %p75 = scmp.ne.s32.totalorder %s66, %s67
      %p76 = scmp.eq.s32.totalorder %s14, 0
      %p77 = por %p75, %p76
      %p78 = scmp.ne.s32.totalorder %s66, %s67
      %p79 = scmp.eq.s32.totalorder %s15, 1
      %p80 = por %p78, %p79
      %p82 = scmp.ne.s32.totalorder %s67, %s81
      %p83 = scmp.eq.s32.totalorder %s15, 0
      %p84 = por %p82, %p83
      %s85 = ssub.s32 %s9, %s16
      %p86 = scmp.eq.s32.totalorder %s85, 0
      %s88 = sadd.s32 %s87, 1
      %s89 = scalar_select %p86, %s87, %s88
      %p92 = pneg %p86
      %p93 = scmp.eq.s32.totalorder %s9, 1
      %p94 = por %p92, %p93
      %p95 = scmp.ne.s32.totalorder %s87, %s90
      %p96 = scmp.eq.s32.totalorder %s9, 0
      %p97 = por %p95, %p96
      %p98 = scmp.ne.s32.totalorder %s87, %s90
      %p99 = scmp.eq.s32.totalorder %s14, 1
      %p100 = por %p98, %p99
      %p101 = scmp.ne.s32.totalorder %s90, %s91
      %p102 = scmp.eq.s32.totalorder %s14, 0
      %p103 = por %p101, %p102
      %p104 = scmp.ne.s32.totalorder %s90, %s91
      %p105 = scmp.eq.s32.totalorder %s15, 1
      %p106 = por %p104, %p105
      %p108 = scmp.ne.s32.totalorder %s91, %s107
      %p109 = scmp.eq.s32.totalorder %s15, 0
      %p110 = por %p108, %p109
      %p111 = scmp.le.s32.totalorder 1, %s9
      %p112 = scmp.lt.s32.totalorder %s9, 3
      %p113 = pnand %p111, %p112
      %p114 = pneg %p113
      // Predicated region
      $region9: #{hourglass_forward.7} parent=5 // pred_check
        _
      $region10: #{hourglass_forward.7} parent=5 // pred_check_branch
        %116 = sbr.rel (%p113) target = $region12
      $region11: #{hourglass_forward.7} parent=5 // pred_region
        %s117 = ssub.s32 %s9, 1
        // Predicated region
        $region13: #{hourglass_forward.7} parent=11 // pred_check
          %p118 = pneg %p30
        $region14: #{hourglass_forward.7} parent=11 // pred_check_branch
          %120 = sbr.rel (%p118) target = $region16
        $region15: #{hourglass_forward.7} parent=11 // pred_region
          _
        $region16: #{hourglass_forward.7} parent=11 // pred_fallthru
          _
        // Predicated region
        $region17: #{hourglass_forward.7} parent=11 // pred_check
          %p121 = pneg %p77
        $region18: #{hourglass_forward.7} parent=11 // pred_check_branch
          %123 = sbr.rel (%p121) target = $region20
        $region19: #{hourglass_forward.7} parent=11 // pred_region
          _
        $region20: #{hourglass_forward.7} parent=11 // pred_fallthru
          _
      $region12: #{hourglass_forward.7} parent=5 // pred_fallthru
        _
      %p124 = scmp.lt.s32.totalorder %s9, 2
      // Predicated region
      $region21: #{hourglass_forward.7} parent=5 // pred_check
        %p125 = pneg %p124
      $region22: #{hourglass_forward.7} parent=5 // pred_check_branch
        %127 = sbr.rel (%p125) target = $region24
      $region23: #{hourglass_forward.7} parent=5 // pred_region
        // Predicated region
        $region25: #{hourglass_forward.7} parent=23 // pred_check
          %p128 = pneg %p50
        $region26: #{hourglass_forward.7} parent=23 // pred_check_branch
          %130 = sbr.rel (%p128) target = $region28
        $region27: #{hourglass_forward.7} parent=23 // pred_region
          %s131 = sand.u32 %s40, 1
          %s132 = sand.u32 %s40, 1
          %s133 = smul.addr %s132, 216
          %s134 = scalar_lea.vmem [#allocation2], %s133
          %s135 = smul.u32 2, %s9
          %s136 = smul.addr %s135, 4
          %s137 = scalar_lea.vmem %s1, %s136
          // Predicated region
          $region29: #{hourglass_forward.7} parent=27 // pred_check
            _
          $region30: #{hourglass_forward.7} parent=27 // pred_check_branch
            %139 = sbr.rel (0) target = $region32
          $region31: #{hourglass_forward.7} parent=27 // pred_region
            // Predicated region
            $region33: #{hourglass_forward.7} parent=31 // pred_check
              _
            $region34: #{hourglass_forward.7} parent=31 // pred_check_branch
              %141 = sbr.rel (0) target = $region36
            $region35: #{hourglass_forward.7} parent=31 // pred_region
              // Predicated region
              $region48: #{hourglass_forward.7} parent=35 // pred_check
                _
              $region49: #{hourglass_forward.7} parent=35 // pred_check_branch
                %209 = sbr.rel (0) target = $region51
              $region50: #{hourglass_forward.7} parent=35 // pred_region
                loop: start=0, step=1, limit=1
                $region52: #{hourglass_forward.7} parent=50 // loop_pre_header
                  _
                $region53: #{hourglass_forward.7} parent=50 // loop_header
                  %s211 = sphi 0, %s215
                  %p212 = scmp.ge.s32.totalorder %s211, 1
                  %s216 = sphi %s137, %s137
                  %s217 = sphi %s134, %s134
                $region54: #{hourglass_forward.7} parent=50 // loop_header_branch
                  %214 = sbr.rel (%p212) target = $region58
                $region55: #{hourglass_forward.7} parent=50 // loop_body
                  %v218 = vld [vmem:[%s216] sm:$0xff]
                  %219 = vst [vmem:[%s217] sm:$0xff] %v218
                  %v220 = vld [vmem:[%s216 + $0x10] sm:$0xff]
                  %221 = vst [vmem:[%s217 + $0x8] sm:$0xff] %v220
                  %v222 = vld [vmem:[%s216 + $0x20] sm:$0xff]
                  %223 = vst [vmem:[%s217 + $0x10] sm:$0xff] %v222
                  %v224 = vld [vmem:[%s216 + $0x30] sm:$0xff]
                  %225 = vst [vmem:[%s217 + $0x18] sm:$0xff] %v224
                  %v226 = vld [vmem:[%s216 + $0x40] sm:$0xff]
                  %227 = vst [vmem:[%s217 + $0x20] sm:$0xff] %v226
                  %v228 = vld [vmem:[%s216 + $0x50] sm:$0xff]
                  %229 = vst [vmem:[%s217 + $0x28] sm:$0xff] %v228
                  %v230 = vld [vmem:[%s216 + $0x60] sm:$0xff]
                  %231 = vst [vmem:[%s217 + $0x30] sm:$0xff] %v230
                  %v232 = vld [vmem:[%s216 + $0x70] sm:$0xff]
                  %233 = vst [vmem:[%s217 + $0x38] sm:$0xff] %v232
                  %v234 = vld [vmem:[%s216 + $0x80] sm:$0xff]
                  %235 = vst [vmem:[%s217 + $0x40] sm:$0xff] %v234
                  %v236 = vld [vmem:[%s216 + $0x90] sm:$0xff]
                  %237 = vst [vmem:[%s217 + $0x48] sm:$0xff] %v236
                  %v238 = vld [vmem:[%s216 + $0xa0] sm:$0xff]
                  %239 = vst [vmem:[%s217 + $0x50] sm:$0xff] %v238
                  %v240 = vld [vmem:[%s216 + $0xb0] sm:$0xff]
                  %241 = vst [vmem:[%s217 + $0x58] sm:$0xff] %v240
                  %v242 = vld [vmem:[%s216 + $0xc0] sm:$0xff]
                  %243 = vst [vmem:[%s217 + $0x60] sm:$0xff] %v242
                  %v244 = vld [vmem:[%s216 + $0xd0] sm:$0xff]
                  %245 = vst [vmem:[%s217 + $0x68] sm:$0xff] %v244
                  %v246 = vld [vmem:[%s216 + $0xe0] sm:$0xff]
                  %247 = vst [vmem:[%s217 + $0x70] sm:$0xff] %v246
                  %v248 = vld [vmem:[%s216 + $0xf0] sm:$0xff]
                  %249 = vst [vmem:[%s217 + $0x78] sm:$0xff] %v248
                  %v250 = vld [vmem:[%s216 + $0x100] sm:$0xff]
                  %251 = vst [vmem:[%s217 + $0x80] sm:$0xff] %v250
                  %v252 = vld [vmem:[%s216 + $0x110] sm:$0xff]
                  %253 = vst [vmem:[%s217 + $0x88] sm:$0xff] %v252
                  %v254 = vld [vmem:[%s216 + $0x120] sm:$0xff]
                  %255 = vst [vmem:[%s217 + $0x90] sm:$0xff] %v254
                  %v256 = vld [vmem:[%s216 + $0x130] sm:$0xff]
                  %257 = vst [vmem:[%s217 + $0x98] sm:$0xff] %v256
                  %v258 = vld [vmem:[%s216 + $0x140] sm:$0xff]
                  %259 = vst [vmem:[%s217 + $0xa0] sm:$0xff] %v258
                  %v260 = vld [vmem:[%s216 + $0x150] sm:$0xff]
                  %261 = vst [vmem:[%s217 + $0xa8] sm:$0xff] %v260
                  %v262 = vld [vmem:[%s216 + $0x160] sm:$0xff]
                  %263 = vst [vmem:[%s217 + $0xb0] sm:$0xff] %v262
                  %v264 = vld [vmem:[%s216 + $0x170] sm:$0xff]
                  %265 = vst [vmem:[%s217 + $0xb8] sm:$0xff] %v264
                  %v266 = vld [vmem:[%s216 + $0x180] sm:$0xff]
                  %267 = vst [vmem:[%s217 + $0xc0] sm:$0xff] %v266
                  %v268 = vld [vmem:[%s216 + $0x190] sm:$0xff]
                  %269 = vst [vmem:[%s217 + $0xc8] sm:$0xff] %v268
                  %v270 = vld [vmem:[%s216 + $0x1a0] sm:$0xff]
                  %271 = vst [vmem:[%s217 + $0xd0] sm:$0xff] %v270
                $region56: #{hourglass_forward.7} parent=50 // loop_footer
                  %s215 = sadd.s32 1, %s211
                $region57: #{hourglass_forward.7} parent=50 // loop_footer_branch
                  %210 = sbr.rel target = $region53
                $region58: #{hourglass_forward.7} parent=50 // loop_exit
                  _
              $region51: #{hourglass_forward.7} parent=35 // pred_fallthru
                _
              // Predicated region
              $region59: #{hourglass_forward.7} parent=35 // pred_check
                _
              $region60: #{hourglass_forward.7} parent=35 // pred_check_branch
                %273 = sbr.rel target = $region62
              $region61: #{hourglass_forward.7} parent=35 // pred_region
                _
              $region62: #{hourglass_forward.7} parent=35 // pred_fallthru
                _
            $region36: #{hourglass_forward.7} parent=31 // pred_fallthru
              _
            // Predicated region
            $region37: #{hourglass_forward.7} parent=31 // pred_check
              _
            $region38: #{hourglass_forward.7} parent=31 // pred_check_branch
              %143 = sbr.rel target = $region40
            $region39: #{hourglass_forward.7} parent=31 // pred_region
              %s145 = ssub.s32 256, 1
              loop: start=0, step=1, limit=1
              $region41: #{hourglass_forward.7} parent=39 // loop_pre_header
                _
              $region42: #{hourglass_forward.7} parent=39 // loop_header
                %s147 = sphi 0, %s151
                %p148 = scmp.ge.s32.totalorder %s147, 1
                %s152 = sphi %s137, %s137
                %s153 = sphi %s134, %s134
              $region43: #{hourglass_forward.7} parent=39 // loop_header_branch
                %150 = sbr.rel (%p148) target = $region47
              $region44: #{hourglass_forward.7} parent=39 // loop_body
                %v154 = vld [vmem:[%s152] sm:%s145]
                %155 = vst [vmem:[%s153] sm:%s145] %v154
                %v156 = vld [vmem:[%s152 + $0x10] sm:%s145]
                %157 = vst [vmem:[%s153 + $0x8] sm:%s145] %v156
                %v158 = vld [vmem:[%s152 + $0x20] sm:%s145]
                %159 = vst [vmem:[%s153 + $0x10] sm:%s145] %v158
                %v160 = vld [vmem:[%s152 + $0x30] sm:%s145]
                %161 = vst [vmem:[%s153 + $0x18] sm:%s145] %v160
                %v162 = vld [vmem:[%s152 + $0x40] sm:%s145]
                %163 = vst [vmem:[%s153 + $0x20] sm:%s145] %v162
                %v164 = vld [vmem:[%s152 + $0x50] sm:%s145]
                %165 = vst [vmem:[%s153 + $0x28] sm:%s145] %v164
                %v166 = vld [vmem:[%s152 + $0x60] sm:%s145]
                %167 = vst [vmem:[%s153 + $0x30] sm:%s145] %v166
                %v168 = vld [vmem:[%s152 + $0x70] sm:%s145]
                %169 = vst [vmem:[%s153 + $0x38] sm:%s145] %v168
                %v170 = vld [vmem:[%s152 + $0x80] sm:%s145]
                %171 = vst [vmem:[%s153 + $0x40] sm:%s145] %v170
                %v172 = vld [vmem:[%s152 + $0x90] sm:%s145]
                %173 = vst [vmem:[%s153 + $0x48] sm:%s145] %v172
                %v174 = vld [vmem:[%s152 + $0xa0] sm:%s145]
                %175 = vst [vmem:[%s153 + $0x50] sm:%s145] %v174
                %v176 = vld [vmem:[%s152 + $0xb0] sm:%s145]
                %177 = vst [vmem:[%s153 + $0x58] sm:%s145] %v176
                %v178 = vld [vmem:[%s152 + $0xc0] sm:%s145]
                %179 = vst [vmem:[%s153 + $0x60] sm:%s145] %v178
                %v180 = vld [vmem:[%s152 + $0xd0] sm:%s145]
                %181 = vst [vmem:[%s153 + $0x68] sm:%s145] %v180
                %v182 = vld [vmem:[%s152 + $0xe0] sm:%s145]
                %183 = vst [vmem:[%s153 + $0x70] sm:%s145] %v182
                %v184 = vld [vmem:[%s152 + $0xf0] sm:%s145]
                %185 = vst [vmem:[%s153 + $0x78] sm:%s145] %v184
                %v186 = vld [vmem:[%s152 + $0x100] sm:%s145]
                %187 = vst [vmem:[%s153 + $0x80] sm:%s145] %v186
                %v188 = vld [vmem:[%s152 + $0x110] sm:%s145]
                %189 = vst [vmem:[%s153 + $0x88] sm:%s145] %v188
                %v190 = vld [vmem:[%s152 + $0x120] sm:%s145]
                %191 = vst [vmem:[%s153 + $0x90] sm:%s145] %v190
                %v192 = vld [vmem:[%s152 + $0x130] sm:%s145]
                %193 = vst [vmem:[%s153 + $0x98] sm:%s145] %v192
                %v194 = vld [vmem:[%s152 + $0x140] sm:%s145]
                %195 = vst [vmem:[%s153 + $0xa0] sm:%s145] %v194
                %v196 = vld [vmem:[%s152 + $0x150] sm:%s145]
                %197 = vst [vmem:[%s153 + $0xa8] sm:%s145] %v196
                %v198 = vld [vmem:[%s152 + $0x160] sm:%s145]
                %199 = vst [vmem:[%s153 + $0xb0] sm:%s145] %v198
                %v200 = vld [vmem:[%s152 + $0x170] sm:%s145]
                %201 = vst [vmem:[%s153 + $0xb8] sm:%s145] %v200
                %v202 = vld [vmem:[%s152 + $0x180] sm:%s145]
                %203 = vst [vmem:[%s153 + $0xc0] sm:%s145] %v202
                %v204 = vld [vmem:[%s152 + $0x190] sm:%s145]
                %205 = vst [vmem:[%s153 + $0xc8] sm:%s145] %v204
                %v206 = vld [vmem:[%s152 + $0x1a0] sm:%s145]
                %207 = vst [vmem:[%s153 + $0xd0] sm:%s145] %v206
              $region45: #{hourglass_forward.7} parent=39 // loop_footer
                %s151 = sadd.s32 1, %s147
              $region46: #{hourglass_forward.7} parent=39 // loop_footer_branch
                %146 = sbr.rel target = $region42
              $region47: #{hourglass_forward.7} parent=39 // loop_exit
                _
            $region40: #{hourglass_forward.7} parent=31 // pred_fallthru
              _
          $region32: #{hourglass_forward.7} parent=27 // pred_fallthru
            _
          %274 = vnop
        $region28: #{hourglass_forward.7} parent=23 // pred_fallthru
          _
      $region24: #{hourglass_forward.7} parent=5 // pred_fallthru
        _
      %p275 = scmp.le.s32.totalorder 1, %s9
      %p276 = scmp.lt.s32.totalorder %s9, 3
      %p277 = pnand %p275, %p276
      %p278 = pneg %p277
      // Predicated region
      $region63: #{hourglass_forward.7} parent=5 // pred_check
        _
      $region64: #{hourglass_forward.7} parent=5 // pred_check_branch
        %280 = sbr.rel (%p277) target = $region66
      $region65: #{hourglass_forward.7} parent=5 // pred_region
        %s281 = ssub.s32 %s9, 1
        %s282 = sand.u32 %s43, 1
        %s283 = sand.u32 %s43, 1
        %s284 = smul.addr %s283, 216
        %s285 = scalar_lea.vmem [#allocation2], %s284
        // Predicated region
        $region67: #{hourglass_forward.7} parent=65 // pred_check
          %p286 = pneg %p56
        $region68: #{hourglass_forward.7} parent=65 // pred_check_branch
          %288 = sbr.rel (%p286) target = $region70
        $region69: #{hourglass_forward.7} parent=65 // pred_region
          _
        $region70: #{hourglass_forward.7} parent=65 // pred_fallthru
          _
        %p289 = pneg %p30
        %p290 = pneg %p27
        %s291 = sand.u32 %s43, 1
        %s292 = sand.u32 %s43, 1
        %s293 = smul.addr %s292, 216
        %s294 = scalar_lea.vmem [#allocation2], %s293
        %p295 = pneg %p56
        %p296 = pneg %p53
        %p297 = pneg %p77
        %p298 = pneg %p74
        %p299 = pneg %p103
        %p300 = pneg %p100
        %s301 = smul.u32 2, %s14
        %p302 = scmp.lt.s32.totalorder %s301, 3
        %s303 = scalar_select %p302, %s301, 3
        %s304 = smul.addr %s303, 8
        %s305 = scalar_lea.vmem %s3, %s304
        %s306 = smul.u32 2, %s14
        %s307 = smul.u32 2, %s14
        %p308 = scmp.lt.s32.totalorder %s307, 3
        %s309 = scalar_select %p308, %s307, 3
        %s310 = smul.addr %s309, 8
        %s311 = scalar_lea.vmem %s3, %s310
        %s312 = smul.u32 2, %s14
        %v314 = vld [vmem:[%s0] sm:$0xff]
        %v315 = vld [vmem:[%s285] sm:$0xff]
        %v316 = vld [vmem:[%s285 + $0x8] sm:$0xff]
        %v317 = vld [vmem:[%s285 + $0x10] sm:$0xff]
        %v318 = vld [vmem:[%s285 + $0x18] sm:$0xff]
        %v319 = vld [vmem:[%s285 + $0x20] sm:$0xff]
        %v320 = vld [vmem:[%s285 + $0x28] sm:$0xff]
        %v321 = vld [vmem:[%s285 + $0x30] sm:$0xff]
        %v322 = vld [vmem:[%s285 + $0x38] sm:$0xff]
        %v323 = vld [vmem:[%s285 + $0x40] sm:$0xff]
        %v324 = vld [vmem:[%s285 + $0x48] sm:$0xff]
        %v325 = vld [vmem:[%s285 + $0x50] sm:$0xff]
        %v326 = vld [vmem:[%s285 + $0x58] sm:$0xff]
        %v327 = vld [vmem:[%s285 + $0x60] sm:$0xff]
        %v328 = vld [vmem:[%s285 + $0x68] sm:$0xff]
        %v329 = vld [vmem:[%s285 + $0x70] sm:$0xff]
        %v330 = vld [vmem:[%s285 + $0x78] sm:$0xff]
        %v331 = vld [vmem:[%s285 + $0x80] sm:$0xff]
        %v332 = vld [vmem:[%s285 + $0x88] sm:$0xff]
        %v333 = vld [vmem:[%s285 + $0x90] sm:$0xff]
        %v334 = vld [vmem:[%s285 + $0x98] sm:$0xff]
        %v335 = vld [vmem:[%s285 + $0xa0] sm:$0xff]
        %v336 = vld [vmem:[%s285 + $0xa8] sm:$0xff]
        %v337 = vld [vmem:[%s285 + $0xb0] sm:$0xff]
        %v338 = vld [vmem:[%s285 + $0xb8] sm:$0xff]
        %v339 = vld [vmem:[%s285 + $0xc0] sm:$0xff]
        %v340 = vld [vmem:[%s285 + $0xc8] sm:$0xff]
        %v341 = vld [vmem:[%s285 + $0xd0] sm:$0xff]
        %v342 = vld [vmem:[%s2] sm:$0xff]
        %344 = vset.pattern.permute.xlu0 0
        %345 = vperm.xlu0 %344, %v342
        %v346 = vpop.permute.xlu0 %345
        %v349 = vunpack.c.l.b16 %v314
        %v350 = vunpack.c.h.b16 %v314
        %v351 = vpack.c.b16 %v349, %v349
        %v352 = vpack.c.b16 %v350, %v350
        %v381 = vunpack.c.l.b16 %v315
        %v382 = vunpack.c.h.b16 %v315
        %v383 = vunpack.c.l.b16 %v316
        %v384 = vunpack.c.h.b16 %v316
        %v385 = vunpack.c.l.b16 %v317
        %v386 = vunpack.c.h.b16 %v317
        %v387 = vunpack.c.l.b16 %v318
        %v388 = vunpack.c.h.b16 %v318
        %v389 = vunpack.c.l.b16 %v319
        %v390 = vunpack.c.h.b16 %v319
        %v391 = vunpack.c.l.b16 %v320
        %v392 = vunpack.c.h.b16 %v320
        %v393 = vunpack.c.l.b16 %v321
        %v394 = vunpack.c.h.b16 %v321
        %v395 = vunpack.c.l.b16 %v322
        %v396 = vunpack.c.h.b16 %v322
        %v397 = vunpack.c.l.b16 %v323
        %v398 = vunpack.c.h.b16 %v323
        %v399 = vunpack.c.l.b16 %v324
        %v400 = vunpack.c.h.b16 %v324
        %v401 = vunpack.c.l.b16 %v325
        %v402 = vunpack.c.h.b16 %v325
        %v403 = vunpack.c.l.b16 %v326
        %v404 = vunpack.c.h.b16 %v326
        %v405 = vunpack.c.l.b16 %v327
        %v406 = vunpack.c.h.b16 %v327
        %v407 = vunpack.c.l.b16 %v328
        %v408 = vunpack.c.h.b16 %v328
        %v409 = vunpack.c.l.b16 %v329
        %v410 = vunpack.c.h.b16 %v329
        %v411 = vunpack.c.l.b16 %v330
        %v412 = vunpack.c.h.b16 %v330
        %v413 = vunpack.c.l.b16 %v331
        %v414 = vunpack.c.h.b16 %v331
        %v415 = vunpack.c.l.b16 %v332
        %v416 = vunpack.c.h.b16 %v332
        %v417 = vunpack.c.l.b16 %v333
        %v418 = vunpack.c.h.b16 %v333
        %v419 = vunpack.c.l.b16 %v334
        %v420 = vunpack.c.h.b16 %v334
        %v421 = vunpack.c.l.b16 %v335
        %v422 = vunpack.c.h.b16 %v335
        %v423 = vunpack.c.l.b16 %v336
        %v424 = vunpack.c.h.b16 %v336
        %v425 = vunpack.c.l.b16 %v337
        %v426 = vunpack.c.h.b16 %v337
        %v427 = vunpack.c.l.b16 %v338
        %v428 = vunpack.c.h.b16 %v338
        %v429 = vunpack.c.l.b16 %v339
        %v430 = vunpack.c.h.b16 %v339
        %v431 = vunpack.c.l.b16 %v340
        %v432 = vunpack.c.h.b16 %v340
        %v433 = vunpack.c.l.b16 %v341
        %v434 = vunpack.c.h.b16 %v341
        %v435 = vpack.c.b16 %v383, %v381
        %v436 = vpack.c.b16 %v384, %v382
        %v437 = vpack.c.b16 %v387, %v385
        %v438 = vpack.c.b16 %v388, %v386
        %v439 = vpack.c.b16 %v391, %v389
        %v440 = vpack.c.b16 %v392, %v390
        %v441 = vpack.c.b16 %v395, %v393
        %v442 = vpack.c.b16 %v396, %v394
        %v443 = vpack.c.b16 %v399, %v397
        %v444 = vpack.c.b16 %v400, %v398
        %v445 = vpack.c.b16 %v403, %v401
        %v446 = vpack.c.b16 %v404, %v402
        %v447 = vpack.c.b16 %v407, %v405
        %v448 = vpack.c.b16 %v408, %v406
        %v449 = vpack.c.b16 %v411, %v409
        %v450 = vpack.c.b16 %v412, %v410
        %v451 = vpack.c.b16 %v415, %v413
        %v452 = vpack.c.b16 %v416, %v414
        %v453 = vpack.c.b16 %v419, %v417
        %v454 = vpack.c.b16 %v420, %v418
        %v455 = vpack.c.b16 %v423, %v421
        %v456 = vpack.c.b16 %v424, %v422
        %v457 = vpack.c.b16 %v427, %v425
        %v458 = vpack.c.b16 %v428, %v426
        %v459 = vpack.c.b16 %v431, %v429
        %v460 = vpack.c.b16 %v432, %v430
        %v461 = vpack.c.b16 %v433, %v433
        %v462 = vpack.c.b16 %v434, %v434
        %vm489 = vcmask 719872
        %v491 = vsel %vm489, %v352, 0
        %vm493 = vcmask 1043456
        %v495 = vsel %vm493, %v461, 0
        %v498 = vsel %vm493, %v462, 0
        %500 = vmatprep.subr.bf16.mxu0 %v450
        %501 = vmatpush1.bf16.msra.mxu0 %v449
        %502 = vmatprep.subr.bf16.mxu0 %v448
        %503 = vmatpush1.bf16.msra.mxu0 %v447
        %504 = vmatprep.subr.bf16.mxu0 %v446
        %505 = vmatpush1.bf16.msra.mxu0 %v445
        %506 = vmatprep.subr.bf16.mxu0 %v444
        %507 = vmatpush1.bf16.msra.mxu0 %v443
        %508 = vmatprep.subr.bf16.mxu0 %v442
        %509 = vmatpush1.bf16.msra.mxu0 %v441
        %510 = vmatprep.subr.bf16.mxu0 %v440
        %511 = vmatpush1.bf16.msra.mxu0 %v439
        %512 = vmatprep.subr.bf16.mxu0 %v438
        %513 = vmatpush1.bf16.msra.mxu0 %v437
        %514 = vmatprep.subr.bf16.mxu0 %v436
        %515 = vmatpush1.bf16.msra.mxu0 %v435
        %516 = vmatprep.subr.bf16.mxu0 0
        %517 = vmatpush2.bf16.msra.mxu0 0
        %518 = vmatprep.subr.bf16.mxu0 0
        %519 = vmatpush2.bf16.msra.mxu0 0
        %520 = vmatprep.subr.bf16.mxu0 %v498
        %521 = vmatpush2.bf16.msra.mxu0 %v495
        %522 = vmatprep.subr.bf16.mxu0 %v460
        %523 = vmatpush2.bf16.msra.mxu0 %v459
        %524 = vmatprep.subr.bf16.mxu0 %v458
        %525 = vmatpush2.bf16.msra.mxu0 %v457
        %526 = vmatprep.subr.bf16.mxu0 %v456
        %527 = vmatpush2.bf16.msra.mxu0 %v455
        %528 = vmatprep.subr.bf16.mxu0 %v454
        %529 = vmatpush2.bf16.msra.mxu0 %v453
        %530 = vmatprep.subr.bf16.mxu0 %v452
        %531 = vmatpush2.bf16.msra.mxu0 %v451
        %532 = vmatprep.mubr.bf16.mxu0 %v491
        %533 = vmatmul.mubr.bf16.gmra.mxu0 %v351
        %v534 = vpop.f32.mrf.mxu0
        %v535 = vadd.f32 %v346, %v534
        %v536 = vpop.f32.mrf.mxu0
        %v537 = vadd.f32 %v346, %v536
        %v538 = vpop.f32.mrf.mxu0
        %v539 = vpop.f32.mrf.mxu0
        %540 = vdwg.mxu0
        %v541 = vmax.f32 %v535, 0.0
        %v542 = vmax.f32 %v537, 0.0
        %543 = vst [vmem:[%s311] sm:$0xff] %v541
        %544 = vst [vmem:[%s311 + $0x8] sm:$0xff] %v542
        %s545 = smul.u32 2, %s14
        %p546 = scmp.lt.s32.totalorder %s545, 3
        %s547 = scalar_select %p546, %s545, 3
        %s548 = smul.addr %s547, 8
        %s549 = scalar_lea.vmem %s3, %s548
        // Predicated region
        $region71: #{hourglass_forward.7} parent=65 // pred_check
          %p550 = pneg %p100
        $region72: #{hourglass_forward.7} parent=65 // pred_check_branch
          %552 = sbr.rel (%p550) target = $region74
        $region73: #{hourglass_forward.7} parent=65 // pred_region
          %s553 = smul.u32 2, %s14
        $region74: #{hourglass_forward.7} parent=65 // pred_fallthru
          _
      $region66: #{hourglass_forward.7} parent=5 // pred_fallthru
        _
      %p554 = scmp.le.s32.totalorder 2, %s9
      // Predicated region
      $region75: #{hourglass_forward.7} parent=5 // pred_check
        %p555 = pneg %p554
      $region76: #{hourglass_forward.7} parent=5 // pred_check_branch
        %557 = sbr.rel (%p555) target = $region78
      $region77: #{hourglass_forward.7} parent=5 // pred_region
        %s558 = ssub.s32 %s9, 2
        // Predicated region
        $region79: #{hourglass_forward.7} parent=77 // pred_check
          %p559 = pneg %p106
        $region80: #{hourglass_forward.7} parent=77 // pred_check_branch
          %561 = sbr.rel (%p559) target = $region82
        $region81: #{hourglass_forward.7} parent=77 // pred_region
          %s562 = smul.u32 2, %s15
          %p563 = scmp.lt.s32.totalorder %s562, 3
          %s564 = scalar_select %p563, %s562, 3
          %s565 = smul.addr %s564, 8
          %s566 = scalar_lea.vmem %s3, %s565
        $region82: #{hourglass_forward.7} parent=77 // pred_fallthru
          _
      $region78: #{hourglass_forward.7} parent=5 // pred_fallthru
        _
    $region6: #{hourglass_forward.7} parent=1 // loop_footer
      %s13 = sadd.s32 1, %s9
    $region7: #{hourglass_forward.7} parent=1 // loop_footer_branch
      %8 = sbr.rel target = $region3
    $region8: #{hourglass_forward.7} parent=1 // loop_exit
      _

// kernel: hourglass_forward.8
$region0: #{hourglass_forward.8}
  #allocation0 [shape = 'u32[]', space=smem, size = 0x4, offset = 0x4, fixed_abs, tag = 'smem constant byte address 0x4 - core index']
  #allocation1 [shape = 'u32[144,128]{1,0:T(1,128)}', space=vmem, size = 0x12000, scoped, tag = 'internal scratch']
  %s0 = inlined_call_operand.vmem [shape: bf16[16,216], index: 0, kind: input, shape index: {}]
  %s1 = inlined_call_operand.vmem [shape: bf16[216,64], index: 1, kind: input, shape index: {}]
  %s2 = inlined_call_operand.vmem [shape: f32[16,1], index: 2, kind: input, shape index: {}]
  %s3 = inlined_call_operand.vmem [shape: f32[16,64], index: 3, kind: output, shape index: {}]
  %s4 = sld [smem:[#allocation0]]
  $region22: #{hourglass_forward.8} parent=0
    _
  %s6 = ssub.s32 1, %s4
  %s7 = scalar_select 0, %s6, %s4
  // Predicated region
  $region2: #{hourglass_forward.8} parent=0 // pred_check
    _
  $region3: #{hourglass_forward.8} parent=0 // pred_check_branch
    %9 = sbr.rel (0) target = $region5
  $region4: #{hourglass_forward.8} parent=0 // pred_region
    _
  $region5: #{hourglass_forward.8} parent=0 // pred_fallthru
    _
  // Predicated region
  $region6: #{hourglass_forward.8} parent=0 // pred_check
    _
  $region7: #{hourglass_forward.8} parent=0 // pred_check_branch
    %11 = sbr.rel (0) target = $region9
  $region8: #{hourglass_forward.8} parent=0 // pred_region
    _
  $region9: #{hourglass_forward.8} parent=0 // pred_fallthru
    _
  // Predicated region
  $region10: #{hourglass_forward.8} parent=0 // pred_check
    _
  $region11: #{hourglass_forward.8} parent=0 // pred_check_branch
    %13 = sbr.rel (0) target = $region13
  $region12: #{hourglass_forward.8} parent=0 // pred_region
    _
  $region13: #{hourglass_forward.8} parent=0 // pred_fallthru
    _
  %v15 = vld [vmem:[%s0] sm:$0xff]
  %v16 = vld [vmem:[%s0 + $0x8] sm:$0xff]
  %v17 = vld [vmem:[%s1] sm:$0xf]
  %v18 = vld [vmem:[%s1 + $0x4] sm:$0xf]
  %v19 = vld [vmem:[%s1 + $0x8] sm:$0xf]
  %v20 = vld [vmem:[%s1 + $0xc] sm:$0xf]
  %v21 = vld [vmem:[%s1 + $0x10] sm:$0xf]
  %v22 = vld [vmem:[%s1 + $0x14] sm:$0xf]
  %v23 = vld [vmem:[%s1 + $0x18] sm:$0xf]
  %v24 = vld [vmem:[%s1 + $0x1c] sm:$0xf]
  %v25 = vld [vmem:[%s1 + $0x20] sm:$0xf]
  %v26 = vld [vmem:[%s1 + $0x24] sm:$0xf]
  %v27 = vld [vmem:[%s1 + $0x28] sm:$0xf]
  %v28 = vld [vmem:[%s1 + $0x2c] sm:$0xf]
  %v29 = vld [vmem:[%s1 + $0x30] sm:$0xf]
  %v30 = vld [vmem:[%s1 + $0x34] sm:$0xf]
  %v31 = vld [vmem:[%s1 + $0x38] sm:$0xf]
  %v32 = vld [vmem:[%s1 + $0x3c] sm:$0xf]
  %v33 = vld [vmem:[%s1 + $0x40] sm:$0xf]
  %v34 = vld [vmem:[%s1 + $0x44] sm:$0xf]
  %v35 = vld [vmem:[%s1 + $0x48] sm:$0xf]
  %v36 = vld [vmem:[%s1 + $0x4c] sm:$0xf]
  %v37 = vld [vmem:[%s1 + $0x50] sm:$0xf]
  %v38 = vld [vmem:[%s1 + $0x54] sm:$0xf]
  %v39 = vld [vmem:[%s1 + $0x58] sm:$0xf]
  %v40 = vld [vmem:[%s1 + $0x5c] sm:$0xf]
  %v41 = vld [vmem:[%s1 + $0x60] sm:$0xf]
  %v42 = vld [vmem:[%s1 + $0x64] sm:$0xf]
  %v43 = vld [vmem:[%s1 + $0x68] sm:$0xf]
  %v44 = vld [vmem:[%s2] sm:$0xff]
  %v45 = vld [vmem:[%s2 + $0x8] sm:$0xff]
  %47 = vset.pattern.permute.xlu0 0
  %48 = vperm.xlu0 %47, %v44
  %v49 = vpop.permute.xlu0 %48
  %52 = vset.pattern.permute.xlu0 0
  %53 = vperm.xlu0 %52, %v45
  %v54 = vpop.permute.xlu0 %53
  %v58 = vunpack.c.l.b16 %v15
  %v59 = vunpack.c.h.b16 %v15
  %v60 = vunpack.c.l.b16 %v16
  %v61 = vunpack.c.h.b16 %v16
  %v62 = vpack.c.b16 %v60, %v58
  %v63 = vpack.c.b16 %v61, %v59
  %v92 = vunpack.c.l.b16 %v17
  %v93 = vunpack.c.l.b16 %v18
  %v94 = vunpack.c.l.b16 %v19
  %v95 = vunpack.c.l.b16 %v20
  %v96 = vunpack.c.l.b16 %v21
  %v97 = vunpack.c.l.b16 %v22
  %v98 = vunpack.c.l.b16 %v23
  %v99 = vunpack.c.l.b16 %v24
  %v100 = vunpack.c.l.b16 %v25
  %v101 = vunpack.c.l.b16 %v26
  %v102 = vunpack.c.l.b16 %v27
  %v103 = vunpack.c.l.b16 %v28
  %v104 = vunpack.c.l.b16 %v29
  %v105 = vunpack.c.l.b16 %v30
  %v106 = vunpack.c.l.b16 %v31
  %v107 = vunpack.c.l.b16 %v32
  %v108 = vunpack.c.l.b16 %v33
  %v109 = vunpack.c.l.b16 %v34
  %v110 = vunpack.c.l.b16 %v35
  %v111 = vunpack.c.l.b16 %v36
  %v112 = vunpack.c.l.b16 %v37
  %v113 = vunpack.c.l.b16 %v38
  %v114 = vunpack.c.l.b16 %v39
  %v115 = vunpack.c.l.b16 %v40
  %v116 = vunpack.c.l.b16 %v41
  %v117 = vunpack.c.l.b16 %v42
  %v118 = vunpack.c.l.b16 %v43
  %v119 = vpack.c.b16 %v93, %v92
  %v120 = vpack.c.b16 %v95, %v94
  %v121 = vpack.c.b16 %v97, %v96
  %v122 = vpack.c.b16 %v99, %v98
  %v123 = vpack.c.b16 %v101, %v100
  %v124 = vpack.c.b16 %v103, %v102
  %v125 = vpack.c.b16 %v105, %v104
  %v126 = vpack.c.b16 %v107, %v106
  %v127 = vpack.c.b16 %v109, %v108
  %v128 = vpack.c.b16 %v111, %v110
  %v129 = vpack.c.b16 %v113, %v112
  %v130 = vpack.c.b16 %v115, %v114
  %v131 = vpack.c.b16 %v117, %v116
  %v132 = vpack.c.b16 %v118, %v118
  %vm146 = vcmask 719872
  %v148 = vsel %vm146, %v63, 0
  %vm150 = vcmask 1043456
  %v152 = vsel %vm150, %v132, 0
  %154 = vmatprep.subr.bf16.mxu0 0
  %155 = vmatpush1.bf16.msra.mxu0 %v126
  %156 = vmatprep.subr.bf16.mxu0 0
  %157 = vmatpush1.bf16.msra.mxu0 %v125
  %158 = vmatprep.subr.bf16.mxu0 0
  %159 = vmatpush1.bf16.msra.mxu0 %v124
  %160 = vmatprep.subr.bf16.mxu0 0
  %161 = vmatpush1.bf16.msra.mxu0 %v123
  %162 = vmatprep.subr.bf16.mxu0 0
  %163 = vmatpush1.bf16.msra.mxu0 %v122
  %164 = vmatprep.subr.bf16.mxu0 0
  %165 = vmatpush1.bf16.msra.mxu0 %v121
  %166 = vmatprep.subr.bf16.mxu0 0
  %167 = vmatpush1.bf16.msra.mxu0 %v120
  %168 = vmatprep.subr.bf16.mxu0 0
  %169 = vmatpush1.bf16.msra.mxu0 %v119
  %170 = vmatprep.subr.bf16.mxu0 0
  %171 = vmatpush2.bf16.msra.mxu0 0
  %172 = vmatprep.subr.bf16.mxu0 0
  %173 = vmatpush2.bf16.msra.mxu0 0
  %174 = vmatprep.subr.bf16.mxu0 0
  %175 = vmatpush2.bf16.msra.mxu0 %v152
  %176 = vmatprep.subr.bf16.mxu0 0
  %177 = vmatpush2.bf16.msra.mxu0 %v131
  %178 = vmatprep.subr.bf16.mxu0 0
  %179 = vmatpush2.bf16.msra.mxu0 %v130
  %180 = vmatprep.subr.bf16.mxu0 0
  %181 = vmatpush2.bf16.msra.mxu0 %v129
  %182 = vmatprep.subr.bf16.mxu0 0
  %183 = vmatpush2.bf16.msra.mxu0 %v128
  %184 = vmatprep.subr.bf16.mxu0 0
  %185 = vmatpush2.bf16.msra.mxu0 %v127
  %186 = vmatprep.mubr.bf16.mxu0 %v148
  %187 = vmatmul.mubr.bf16.gmra.mxu0 %v62
  %v188 = vpop.f32.mrf.mxu0
  %v189 = vadd.f32 %v49, %v188
  %v190 = vpop.f32.mrf.mxu0
  %v191 = vpop.f32.mrf.mxu0
  %v192 = vadd.f32 %v54, %v191
  %v193 = vpop.f32.mrf.mxu0
  %194 = vdwg.mxu0
  %v195 = vmax.f32 %v189, 0.0
  %v196 = vmax.f32 %v192, 0.0
  %vm197 = vcmask 523264
  %198 = vst.msk [vmem:[%s3] sm:$0xff] %vm197, %v195
  %199 = vst.msk [vmem:[%s3 + $0x8] sm:$0xff] %vm197, %v196
  // Predicated region
  $region14: #{hourglass_forward.8} parent=0 // pred_check
    _
  $region15: #{hourglass_forward.8} parent=0 // pred_check_branch
    %201 = sbr.rel (0) target = $region17
  $region16: #{hourglass_forward.8} parent=0 // pred_region
    _
  $region17: #{hourglass_forward.8} parent=0 // pred_fallthru
    _
  // Predicated region
  $region18: #{hourglass_forward.8} parent=0 // pred_check
    _
  $region19: #{hourglass_forward.8} parent=0 // pred_check_branch
    %203 = sbr.rel (0) target = $region21
  $region20: #{hourglass_forward.8} parent=0 // pred_region
    _
  $region21: #{hourglass_forward.8} parent=0 // pred_fallthru
    _

// kernel: hourglass_forward.9
$region0: #{hourglass_forward.9}
  #allocation0 [shape = 'u32[]', space=smem, size = 0x4, offset = 0x4, fixed_abs, tag = 'smem constant byte address 0x4 - core index']
  #allocation1 [shape = 'u32[144,128]{1,0:T(1,128)}', space=vmem, size = 0x12000, scoped, tag = 'internal scratch']
  %s0 = inlined_call_operand.vmem [shape: bf16[16,432], index: 0, kind: input, shape index: {}]
  %s1 = inlined_call_operand.vmem [shape: bf16[432,64], index: 1, kind: input, shape index: {}]
  %s2 = inlined_call_operand.vmem [shape: f32[16,1], index: 2, kind: input, shape index: {}]
  %s3 = inlined_call_operand.vmem [shape: f32[16,64], index: 3, kind: output, shape index: {}]
  %s4 = sld [smem:[#allocation0]]
  $region22: #{hourglass_forward.9} parent=0
    _
  %s6 = ssub.s32 1, %s4
  %s7 = scalar_select 0, %s6, %s4
  // Predicated region
  $region2: #{hourglass_forward.9} parent=0 // pred_check
    _
  $region3: #{hourglass_forward.9} parent=0 // pred_check_branch
    %9 = sbr.rel (0) target = $region5
  $region4: #{hourglass_forward.9} parent=0 // pred_region
    _
  $region5: #{hourglass_forward.9} parent=0 // pred_fallthru
    _
  // Predicated region
  $region6: #{hourglass_forward.9} parent=0 // pred_check
    _
  $region7: #{hourglass_forward.9} parent=0 // pred_check_branch
    %11 = sbr.rel (0) target = $region9
  $region8: #{hourglass_forward.9} parent=0 // pred_region
    _
  $region9: #{hourglass_forward.9} parent=0 // pred_fallthru
    _
  // Predicated region
  $region10: #{hourglass_forward.9} parent=0 // pred_check
    _
  $region11: #{hourglass_forward.9} parent=0 // pred_check_branch
    %13 = sbr.rel (0) target = $region13
  $region12: #{hourglass_forward.9} parent=0 // pred_region
    _
  $region13: #{hourglass_forward.9} parent=0 // pred_fallthru
    _
  %v15 = vld [vmem:[%s0] sm:$0xff]
  %v16 = vld [vmem:[%s0 + $0x8] sm:$0xff]
  %v17 = vld [vmem:[%s0 + $0x10] sm:$0xff]
  %v18 = vld [vmem:[%s0 + $0x18] sm:$0xff]
  %v19 = vld [vmem:[%s1] sm:$0xf]
  %v20 = vld [vmem:[%s1 + $0x4] sm:$0xf]
  %v21 = vld [vmem:[%s1 + $0x8] sm:$0xf]
  %v22 = vld [vmem:[%s1 + $0xc] sm:$0xf]
  %v23 = vld [vmem:[%s1 + $0x10] sm:$0xf]
  %v24 = vld [vmem:[%s1 + $0x14] sm:$0xf]
  %v25 = vld [vmem:[%s1 + $0x18] sm:$0xf]
  %v26 = vld [vmem:[%s1 + $0x1c] sm:$0xf]
  %v27 = vld [vmem:[%s1 + $0x20] sm:$0xf]
  %v28 = vld [vmem:[%s1 + $0x24] sm:$0xf]
  %v29 = vld [vmem:[%s1 + $0x28] sm:$0xf]
  %v30 = vld [vmem:[%s1 + $0x2c] sm:$0xf]
  %v31 = vld [vmem:[%s1 + $0x30] sm:$0xf]
  %v32 = vld [vmem:[%s1 + $0x34] sm:$0xf]
  %v33 = vld [vmem:[%s1 + $0x38] sm:$0xf]
  %v34 = vld [vmem:[%s1 + $0x3c] sm:$0xf]
  %v35 = vld [vmem:[%s1 + $0x40] sm:$0xf]
  %v36 = vld [vmem:[%s1 + $0x44] sm:$0xf]
  %v37 = vld [vmem:[%s1 + $0x48] sm:$0xf]
  %v38 = vld [vmem:[%s1 + $0x4c] sm:$0xf]
  %v39 = vld [vmem:[%s1 + $0x50] sm:$0xf]
  %v40 = vld [vmem:[%s1 + $0x54] sm:$0xf]
  %v41 = vld [vmem:[%s1 + $0x58] sm:$0xf]
  %v42 = vld [vmem:[%s1 + $0x5c] sm:$0xf]
  %v43 = vld [vmem:[%s1 + $0x60] sm:$0xf]
  %v44 = vld [vmem:[%s1 + $0x64] sm:$0xf]
  %v45 = vld [vmem:[%s1 + $0x68] sm:$0xf]
  %v46 = vld [vmem:[%s1 + $0x6c] sm:$0xf]
  %v47 = vld [vmem:[%s1 + $0x70] sm:$0xf]
  %v48 = vld [vmem:[%s1 + $0x74] sm:$0xf]
  %v49 = vld [vmem:[%s1 + $0x78] sm:$0xf]
  %v50 = vld [vmem:[%s1 + $0x7c] sm:$0xf]
  %v51 = vld [vmem:[%s1 + $0x80] sm:$0xf]
  %v52 = vld [vmem:[%s1 + $0x84] sm:$0xf]
  %v53 = vld [vmem:[%s1 + $0x88] sm:$0xf]
  %v54 = vld [vmem:[%s1 + $0x8c] sm:$0xf]
  %v55 = vld [vmem:[%s1 + $0x90] sm:$0xf]
  %v56 = vld [vmem:[%s1 + $0x94] sm:$0xf]
  %v57 = vld [vmem:[%s1 + $0x98] sm:$0xf]
  %v58 = vld [vmem:[%s1 + $0x9c] sm:$0xf]
  %v59 = vld [vmem:[%s1 + $0xa0] sm:$0xf]
  %v60 = vld [vmem:[%s1 + $0xa4] sm:$0xf]
  %v61 = vld [vmem:[%s1 + $0xa8] sm:$0xf]
  %v62 = vld [vmem:[%s1 + $0xac] sm:$0xf]
  %v63 = vld [vmem:[%s1 + $0xb0] sm:$0xf]
  %v64 = vld [vmem:[%s1 + $0xb4] sm:$0xf]
  %v65 = vld [vmem:[%s1 + $0xb8] sm:$0xf]
  %v66 = vld [vmem:[%s1 + $0xbc] sm:$0xf]
  %v67 = vld [vmem:[%s1 + $0xc0] sm:$0xf]
  %v68 = vld [vmem:[%s1 + $0xc4] sm:$0xf]
  %v69 = vld [vmem:[%s1 + $0xc8] sm:$0xf]
  %v70 = vld [vmem:[%s1 + $0xcc] sm:$0xf]
  %v71 = vld [vmem:[%s1 + $0xd0] sm:$0xf]
  %v72 = vld [vmem:[%s1 + $0xd4] sm:$0xf]
  %v73 = vld [vmem:[%s2] sm:$0xff]
  %v74 = vld [vmem:[%s2 + $0x8] sm:$0xff]
  %76 = vset.pattern.permute.xlu0 0
  %77 = vperm.xlu0 %76, %v73
  %v78 = vpop.permute.xlu0 %77
  %81 = vset.pattern.permute.xlu0 0
  %82 = vperm.xlu0 %81, %v74
  %v83 = vpop.permute.xlu0 %82
  %v89 = vunpack.c.l.b16 %v15
  %v90 = vunpack.c.h.b16 %v15
  %v91 = vunpack.c.l.b16 %v16
  %v92 = vunpack.c.h.b16 %v16
  %v93 = vunpack.c.l.b16 %v17
  %v94 = vunpack.c.h.b16 %v17
  %v95 = vunpack.c.l.b16 %v18
  %v96 = vunpack.c.h.b16 %v18
  %v97 = vpack.c.b16 %v93, %v89
  %v98 = vpack.c.b16 %v94, %v90
  %v99 = vpack.c.b16 %v95, %v91
  %v100 = vpack.c.b16 %v96, %v92
  %v158 = vunpack.c.l.b16 %v19
  %v159 = vunpack.c.l.b16 %v20
  %v160 = vunpack.c.l.b16 %v21
  %v161 = vunpack.c.l.b16 %v22
  %v162 = vunpack.c.l.b16 %v23
  %v163 = vunpack.c.l.b16 %v24
  %v164 = vunpack.c.l.b16 %v25
  %v165 = vunpack.c.l.b16 %v26
  %v166 = vunpack.c.l.b16 %v27
  %v167 = vunpack.c.l.b16 %v28
  %v168 = vunpack.c.l.b16 %v29
  %v169 = vunpack.c.l.b16 %v30
  %v170 = vunpack.c.l.b16 %v31
  %v171 = vunpack.c.l.b16 %v32
  %v172 = vunpack.c.l.b16 %v33
  %v173 = vunpack.c.l.b16 %v34
  %v174 = vunpack.c.l.b16 %v35
  %v175 = vunpack.c.l.b16 %v36
  %v176 = vunpack.c.l.b16 %v37
  %v177 = vunpack.c.l.b16 %v38
  %v178 = vunpack.c.l.b16 %v39
  %v179 = vunpack.c.l.b16 %v40
  %v180 = vunpack.c.l.b16 %v41
  %v181 = vunpack.c.l.b16 %v42
  %v182 = vunpack.c.l.b16 %v43
  %v183 = vunpack.c.l.b16 %v44
  %v184 = vunpack.c.l.b16 %v45
  %v185 = vunpack.c.l.b16 %v46
  %v186 = vunpack.c.l.b16 %v47
  %v187 = vunpack.c.l.b16 %v48
  %v188 = vunpack.c.l.b16 %v49
  %v189 = vunpack.c.l.b16 %v50
  %v190 = vunpack.c.l.b16 %v51
  %v191 = vunpack.c.l.b16 %v52
  %v192 = vunpack.c.l.b16 %v53
  %v193 = vunpack.c.l.b16 %v54
  %v194 = vunpack.c.l.b16 %v55
  %v195 = vunpack.c.l.b16 %v56
  %v196 = vunpack.c.l.b16 %v57
  %v197 = vunpack.c.l.b16 %v58
  %v198 = vunpack.c.l.b16 %v59
  %v199 = vunpack.c.l.b16 %v60
  %v200 = vunpack.c.l.b16 %v61
  %v201 = vunpack.c.l.b16 %v62
  %v202 = vunpack.c.l.b16 %v63
  %v203 = vunpack.c.l.b16 %v64
  %v204 = vunpack.c.l.b16 %v65
  %v205 = vunpack.c.l.b16 %v66
  %v206 = vunpack.c.l.b16 %v67
  %v207 = vunpack.c.l.b16 %v68
  %v208 = vunpack.c.l.b16 %v69
  %v209 = vunpack.c.l.b16 %v70
  %v210 = vunpack.c.l.b16 %v71
  %v211 = vunpack.c.l.b16 %v72
  %v212 = vpack.c.b16 %v159, %v158
  %v213 = vpack.c.b16 %v161, %v160
  %v214 = vpack.c.b16 %v163, %v162
  %v215 = vpack.c.b16 %v165, %v164
  %v216 = vpack.c.b16 %v167, %v166
  %v217 = vpack.c.b16 %v169, %v168
  %v218 = vpack.c.b16 %v171, %v170
  %v219 = vpack.c.b16 %v173, %v172
  %v220 = vpack.c.b16 %v175, %v174
  %v221 = vpack.c.b16 %v177, %v176
  %v222 = vpack.c.b16 %v179, %v178
  %v223 = vpack.c.b16 %v181, %v180
  %v224 = vpack.c.b16 %v183, %v182
  %v225 = vpack.c.b16 %v185, %v184
  %v226 = vpack.c.b16 %v187, %v186
  %v227 = vpack.c.b16 %v189, %v188
  %v228 = vpack.c.b16 %v191, %v190
  %v229 = vpack.c.b16 %v193, %v192
  %v230 = vpack.c.b16 %v195, %v194
  %v231 = vpack.c.b16 %v197, %v196
  %v232 = vpack.c.b16 %v199, %v198
  %v233 = vpack.c.b16 %v201, %v200
  %v234 = vpack.c.b16 %v203, %v202
  %v235 = vpack.c.b16 %v205, %v204
  %v236 = vpack.c.b16 %v207, %v206
  %v237 = vpack.c.b16 %v209, %v208
  %v238 = vpack.c.b16 %v211, %v210
  %vm266 = vcmask 392192
  %v268 = vsel %vm266, %v100, 0
  %270 = vmatprep.subr.bf16.mxu0 0
  %271 = vmatpush1.bf16.msra.mxu0 %v219
  %272 = vmatprep.subr.bf16.mxu0 0
  %273 = vmatpush1.bf16.msra.mxu0 %v218
  %274 = vmatprep.subr.bf16.mxu0 0
  %275 = vmatpush1.bf16.msra.mxu0 %v217
  %276 = vmatprep.subr.bf16.mxu0 0
  %277 = vmatpush1.bf16.msra.mxu0 %v216
  %278 = vmatprep.subr.bf16.mxu0 0
  %279 = vmatpush1.bf16.msra.mxu0 %v215
  %280 = vmatprep.subr.bf16.mxu0 0
  %281 = vmatpush1.bf16.msra.mxu0 %v214
  %282 = vmatprep.subr.bf16.mxu0 0
  %283 = vmatpush1.bf16.msra.mxu0 %v213
  %284 = vmatprep.subr.bf16.mxu0 0
  %285 = vmatpush1.bf16.msra.mxu0 %v212
  %286 = vmatprep.subr.bf16.mxu0 0
  %287 = vmatpush2.bf16.msra.mxu0 %v227
  %288 = vmatprep.subr.bf16.mxu0 0
  %289 = vmatpush2.bf16.msra.mxu0 %v226
  %290 = vmatprep.subr.bf16.mxu0 0
  %291 = vmatpush2.bf16.msra.mxu0 %v225
  %292 = vmatprep.subr.bf16.mxu0 0
  %293 = vmatpush2.bf16.msra.mxu0 %v224
  %294 = vmatprep.subr.bf16.mxu0 0
  %295 = vmatpush2.bf16.msra.mxu0 %v223
  %296 = vmatprep.subr.bf16.mxu0 0
  %297 = vmatpush2.bf16.msra.mxu0 %v222
  %298 = vmatprep.subr.bf16.mxu0 0
  %299 = vmatpush2.bf16.msra.mxu0 %v221
  %300 = vmatprep.subr.bf16.mxu0 0
  %301 = vmatpush2.bf16.msra.mxu0 %v220
  %302 = vmatprep.mubr.bf16.mxu0 %v98
  %303 = vmatmul.mubr.bf16.gmra.mxu0 %v97
  %v304 = vpop.f32.mrf.mxu0
  %v305 = vadd.f32 %v78, %v304
  %v306 = vpop.f32.mrf.mxu0
  %v307 = vpop.f32.mrf.mxu0
  %v308 = vadd.f32 %v83, %v307
  %v309 = vpop.f32.mrf.mxu0
  %310 = vdwg.mxu0
  %311 = vmatprep.subr.bf16.mxu0 0
  %312 = vmatpush1.bf16.msra.mxu0 %v235
  %313 = vmatprep.subr.bf16.mxu0 0
  %314 = vmatpush1.bf16.msra.mxu0 %v234
  %315 = vmatprep.subr.bf16.mxu0 0
  %316 = vmatpush1.bf16.msra.mxu0 %v233
  %317 = vmatprep.subr.bf16.mxu0 0
  %318 = vmatpush1.bf16.msra.mxu0 %v232
  %319 = vmatprep.subr.bf16.mxu0 0
  %320 = vmatpush1.bf16.msra.mxu0 %v231
  %321 = vmatprep.subr.bf16.mxu0 0
  %322 = vmatpush1.bf16.msra.mxu0 %v230
  %323 = vmatprep.subr.bf16.mxu0 0
  %324 = vmatpush1.bf16.msra.mxu0 %v229
  %325 = vmatprep.subr.bf16.mxu0 0
  %326 = vmatpush1.bf16.msra.mxu0 %v228
  %327 = vmatprep.subr.bf16.mxu0 0
  %328 = vmatpush2.bf16.msra.mxu0 0
  %329 = vmatprep.subr.bf16.mxu0 0
  %330 = vmatpush2.bf16.msra.mxu0 0
  %331 = vmatprep.subr.bf16.mxu0 0
  %332 = vmatpush2.bf16.msra.mxu0 0
  %333 = vmatprep.subr.bf16.mxu0 0
  %334 = vmatpush2.bf16.msra.mxu0 0
  %335 = vmatprep.subr.bf16.mxu0 0
  %336 = vmatpush2.bf16.msra.mxu0 0
  %337 = vmatprep.subr.bf16.mxu0 0
  %338 = vmatpush2.bf16.msra.mxu0 %v238
  %339 = vmatprep.subr.bf16.mxu0 0
  %340 = vmatpush2.bf16.msra.mxu0 %v237
  %341 = vmatprep.subr.bf16.mxu0 0
  %342 = vmatpush2.bf16.msra.mxu0 %v236
  %343 = vmatprep.mubr.bf16.mxu0 %v268
  %344 = vmatmul.mubr.bf16.gmra.mxu0 %v99
  %v345 = vpop.f32.mrf.mxu0
  %v346 = vadd.f32 %v305, %v345
  %v347 = vpop.f32.mrf.mxu0
  %v348 = vpop.f32.mrf.mxu0
  %v349 = vadd.f32 %v308, %v348
  %v350 = vpop.f32.mrf.mxu0
  %351 = vdwg.mxu0
  %v352 = vmax.f32 %v346, 0.0
  %v353 = vmax.f32 %v349, 0.0
  %vm354 = vcmask 523264
  %355 = vst.msk [vmem:[%s3] sm:$0xff] %vm354, %v352
  %356 = vst.msk [vmem:[%s3 + $0x8] sm:$0xff] %vm354, %v353
  // Predicated region
  $region14: #{hourglass_forward.9} parent=0 // pred_check
    _
  $region15: #{hourglass_forward.9} parent=0 // pred_check_branch
    %358 = sbr.rel (0) target = $region17
  $region16: #{hourglass_forward.9} parent=0 // pred_region
    _
  $region17: #{hourglass_forward.9} parent=0 // pred_fallthru
    _
  // Predicated region
  $region18: #{hourglass_forward.9} parent=0 // pred_check
    _
  $region19: #{hourglass_forward.9} parent=0 // pred_check_branch
    %360 = sbr.rel (0) target = $region21
  $region20: #{hourglass_forward.9} parent=0 // pred_region
    _
  $region21: #{hourglass_forward.9} parent=0 // pred_fallthru
    _

// kernel: hourglass_forward.10
$region0: #{hourglass_forward.10}
  #allocation0 [shape = 'u32[]', space=smem, size = 0x4, offset = 0x4, fixed_abs, tag = 'smem constant byte address 0x4 - core index']
  #allocation1 [shape = 'u32[144,128]{1,0:T(1,128)}', space=vmem, size = 0x12000, scoped, tag = 'internal scratch']
  %s0 = inlined_call_operand.vmem [shape: bf16[64,192], index: 0, kind: input, shape index: {}]
  %s1 = inlined_call_operand.vmem [shape: bf16[192,64], index: 1, kind: input, shape index: {}]
  %s2 = inlined_call_operand.vmem [shape: f32[64,1], index: 2, kind: input, shape index: {}]
  %s3 = inlined_call_operand.vmem [shape: f32[64,64], index: 3, kind: output, shape index: {}]
  %s4 = sld [smem:[#allocation0]]
  $region22: #{hourglass_forward.10} parent=0
    _
  %s6 = ssub.s32 1, %s4
  %s7 = scalar_select 0, %s6, %s4
  // Predicated region
  $region2: #{hourglass_forward.10} parent=0 // pred_check
    _
  $region3: #{hourglass_forward.10} parent=0 // pred_check_branch
    %9 = sbr.rel (0) target = $region5
  $region4: #{hourglass_forward.10} parent=0 // pred_region
    _
  $region5: #{hourglass_forward.10} parent=0 // pred_fallthru
    _
  // Predicated region
  $region6: #{hourglass_forward.10} parent=0 // pred_check
    _
  $region7: #{hourglass_forward.10} parent=0 // pred_check_branch
    %11 = sbr.rel (0) target = $region9
  $region8: #{hourglass_forward.10} parent=0 // pred_region
    _
  $region9: #{hourglass_forward.10} parent=0 // pred_fallthru
    _
  // Predicated region
  $region10: #{hourglass_forward.10} parent=0 // pred_check
    _
  $region11: #{hourglass_forward.10} parent=0 // pred_check_branch
    %13 = sbr.rel (0) target = $region13
  $region12: #{hourglass_forward.10} parent=0 // pred_region
    _
  $region13: #{hourglass_forward.10} parent=0 // pred_fallthru
    _
  %v15 = vld [vmem:[%s0] sm:$0xff]
  %v16 = vld [vmem:[%s0 + $0x8] sm:$0xff]
  %v17 = vld [vmem:[%s0 + $0x10] sm:$0xff]
  %v18 = vld [vmem:[%s0 + $0x18] sm:$0xff]
  %v19 = vld [vmem:[%s0 + $0x20] sm:$0xff]
  %v20 = vld [vmem:[%s0 + $0x28] sm:$0xff]
  %v21 = vld [vmem:[%s0 + $0x30] sm:$0xff]
  %v22 = vld [vmem:[%s0 + $0x38] sm:$0xff]
  %v23 = vld [vmem:[%s1] sm:$0xf]
  %v24 = vld [vmem:[%s1 + $0x4] sm:$0xf]
  %v25 = vld [vmem:[%s1 + $0x8] sm:$0xf]
  %v26 = vld [vmem:[%s1 + $0xc] sm:$0xf]
  %v27 = vld [vmem:[%s1 + $0x10] sm:$0xf]
  %v28 = vld [vmem:[%s1 + $0x14] sm:$0xf]
  %v29 = vld [vmem:[%s1 + $0x18] sm:$0xf]
  %v30 = vld [vmem:[%s1 + $0x1c] sm:$0xf]
  %v31 = vld [vmem:[%s1 + $0x20] sm:$0xf]
  %v32 = vld [vmem:[%s1 + $0x24] sm:$0xf]
  %v33 = vld [vmem:[%s1 + $0x28] sm:$0xf]
  %v34 = vld [vmem:[%s1 + $0x2c] sm:$0xf]
  %v35 = vld [vmem:[%s1 + $0x30] sm:$0xf]
  %v36 = vld [vmem:[%s1 + $0x34] sm:$0xf]
  %v37 = vld [vmem:[%s1 + $0x38] sm:$0xf]
  %v38 = vld [vmem:[%s1 + $0x3c] sm:$0xf]
  %v39 = vld [vmem:[%s1 + $0x40] sm:$0xf]
  %v40 = vld [vmem:[%s1 + $0x44] sm:$0xf]
  %v41 = vld [vmem:[%s1 + $0x48] sm:$0xf]
  %v42 = vld [vmem:[%s1 + $0x4c] sm:$0xf]
  %v43 = vld [vmem:[%s1 + $0x50] sm:$0xf]
  %v44 = vld [vmem:[%s1 + $0x54] sm:$0xf]
  %v45 = vld [vmem:[%s1 + $0x58] sm:$0xf]
  %v46 = vld [vmem:[%s1 + $0x5c] sm:$0xf]
  %v47 = vld [vmem:[%s2] sm:$0xff]
  %v48 = vld [vmem:[%s2 + $0x8] sm:$0xff]
  %v49 = vld [vmem:[%s2 + $0x10] sm:$0xff]
  %v50 = vld [vmem:[%s2 + $0x18] sm:$0xff]
  %v51 = vld [vmem:[%s2 + $0x20] sm:$0xff]
  %v52 = vld [vmem:[%s2 + $0x28] sm:$0xff]
  %v53 = vld [vmem:[%s2 + $0x30] sm:$0xff]
  %v54 = vld [vmem:[%s2 + $0x38] sm:$0xff]
  %56 = vset.pattern.permute.xlu0 0
  %57 = vperm.xlu0 %56, %v47
  %v58 = vpop.permute.xlu0 %57
  %61 = vset.pattern.permute.xlu0 0
  %62 = vperm.xlu0 %61, %v48
  %v63 = vpop.permute.xlu0 %62
  %66 = vset.pattern.permute.xlu0 0
  %67 = vperm.xlu0 %66, %v49
  %v68 = vpop.permute.xlu0 %67
  %71 = vset.pattern.permute.xlu0 0
  %72 = vperm.xlu0 %71, %v50
  %v73 = vpop.permute.xlu0 %72
  %76 = vset.pattern.permute.xlu0 0
  %77 = vperm.xlu0 %76, %v51
  %v78 = vpop.permute.xlu0 %77
  %81 = vset.pattern.permute.xlu0 0
  %82 = vperm.xlu0 %81, %v52
  %v83 = vpop.permute.xlu0 %82
  %86 = vset.pattern.permute.xlu0 0
  %87 = vperm.xlu0 %86, %v53
  %v88 = vpop.permute.xlu0 %87
  %91 = vset.pattern.permute.xlu0 0
  %92 = vperm.xlu0 %91, %v54
  %v93 = vpop.permute.xlu0 %92
  %v103 = vunpack.c.l.b16 %v15
  %v104 = vunpack.c.h.b16 %v15
  %v105 = vunpack.c.l.b16 %v16
  %v106 = vunpack.c.h.b16 %v16
  %v107 = vunpack.c.l.b16 %v17
  %v108 = vunpack.c.h.b16 %v17
  %v109 = vunpack.c.l.b16 %v18
  %v110 = vunpack.c.h.b16 %v18
  %v111 = vunpack.c.l.b16 %v19
  %v112 = vunpack.c.h.b16 %v19
  %v113 = vunpack.c.l.b16 %v20
  %v114 = vunpack.c.h.b16 %v20
  %v115 = vunpack.c.l.b16 %v21
  %v116 = vunpack.c.h.b16 %v21
  %v117 = vunpack.c.l.b16 %v22
  %v118 = vunpack.c.h.b16 %v22
  %v119 = vpack.c.b16 %v105, %v103
  %v120 = vpack.c.b16 %v106, %v104
  %v121 = vpack.c.b16 %v109, %v107
  %v122 = vpack.c.b16 %v110, %v108
  %v123 = vpack.c.b16 %v113, %v111
  %v124 = vpack.c.b16 %v114, %v112
  %v125 = vpack.c.b16 %v117, %v115
  %v126 = vpack.c.b16 %v118, %v116
  %v155 = vunpack.c.l.b16 %v23
  %v156 = vunpack.c.l.b16 %v24
  %v157 = vunpack.c.l.b16 %v25
  %v158 = vunpack.c.l.b16 %v26
  %v159 = vunpack.c.l.b16 %v27
  %v160 = vunpack.c.l.b16 %v28
  %v161 = vunpack.c.l.b16 %v29
  %v162 = vunpack.c.l.b16 %v30
  %v163 = vunpack.c.l.b16 %v31
  %v164 = vunpack.c.l.b16 %v32
  %v165 = vunpack.c.l.b16 %v33
  %v166 = vunpack.c.l.b16 %v34
  %v167 = vunpack.c.l.b16 %v35
  %v168 = vunpack.c.l.b16 %v36
  %v169 = vunpack.c.l.b16 %v37
  %v170 = vunpack.c.l.b16 %v38
  %v171 = vunpack.c.l.b16 %v39
  %v172 = vunpack.c.l.b16 %v40
  %v173 = vunpack.c.l.b16 %v41
  %v174 = vunpack.c.l.b16 %v42
  %v175 = vunpack.c.l.b16 %v43
  %v176 = vunpack.c.l.b16 %v44
  %v177 = vunpack.c.l.b16 %v45
  %v178 = vunpack.c.l.b16 %v46
  %v179 = vpack.c.b16 %v156, %v155
  %v180 = vpack.c.b16 %v158, %v157
  %v181 = vpack.c.b16 %v160, %v159
  %v182 = vpack.c.b16 %v162, %v161
  %v183 = vpack.c.b16 %v164, %v163
  %v184 = vpack.c.b16 %v166, %v165
  %v185 = vpack.c.b16 %v168, %v167
  %v186 = vpack.c.b16 %v170, %v169
  %v187 = vpack.c.b16 %v172, %v171
  %v188 = vpack.c.b16 %v174, %v173
  %v189 = vpack.c.b16 %v176, %v175
  %v190 = vpack.c.b16 %v178, %v177
  %vm203 = vcmask 523264
  %v205 = vsel %vm203, %v120, 0
  %v208 = vsel %vm203, %v122, 0
  %v211 = vsel %vm203, %v124, 0
  %v214 = vsel %vm203, %v126, 0
  %216 = vmatprep.subr.bf16.mxu0 0
  %217 = vmatpush1.bf16.msra.mxu0 %v186
  %218 = vmatprep.subr.bf16.mxu0 0
  %219 = vmatpush1.bf16.msra.mxu0 %v185
  %220 = vmatprep.subr.bf16.mxu0 0
  %221 = vmatpush1.bf16.msra.mxu0 %v184
  %222 = vmatprep.subr.bf16.mxu0 0
  %223 = vmatpush1.bf16.msra.mxu0 %v183
  %224 = vmatprep.subr.bf16.mxu0 0
  %225 = vmatpush1.bf16.msra.mxu0 %v182
  %226 = vmatprep.subr.bf16.mxu0 0
  %227 = vmatpush1.bf16.msra.mxu0 %v181
  %228 = vmatprep.subr.bf16.mxu0 0
  %229 = vmatpush1.bf16.msra.mxu0 %v180
  %230 = vmatprep.subr.bf16.mxu0 0
  %231 = vmatpush1.bf16.msra.mxu0 %v179
  %232 = vmatprep.subr.bf16.mxu0 0
  %233 = vmatpush2.bf16.msra.mxu0 0
  %234 = vmatprep.subr.bf16.mxu0 0
  %235 = vmatpush2.bf16.msra.mxu0 0
  %236 = vmatprep.subr.bf16.mxu0 0
  %237 = vmatpush2.bf16.msra.mxu0 0
  %238 = vmatprep.subr.bf16.mxu0 0
  %239 = vmatpush2.bf16.msra.mxu0 0
  %240 = vmatprep.subr.bf16.mxu0 0
  %241 = vmatpush2.bf16.msra.mxu0 %v190
  %242 = vmatprep.subr.bf16.mxu0 0
  %243 = vmatpush2.bf16.msra.mxu0 %v189
  %244 = vmatprep.subr.bf16.mxu0 0
  %245 = vmatpush2.bf16.msra.mxu0 %v188
  %246 = vmatprep.subr.bf16.mxu0 0
  %247 = vmatpush2.bf16.msra.mxu0 %v187
  %248 = vmatprep.mubr.bf16.mxu0 %v205
  %249 = vmatmul.mubr.bf16.gmra.mxu0 %v119
  %v250 = vpop.f32.mrf.mxu0
  %v251 = vadd.f32 %v58, %v250
  %v252 = vpop.f32.mrf.mxu0
  %v253 = vpop.f32.mrf.mxu0
  %v254 = vadd.f32 %v63, %v253
  %v255 = vpop.f32.mrf.mxu0
  %256 = vmatprep.mubr.bf16.mxu0 %v208
  %257 = vmatmul.mubr.bf16.gmra.mxu0 %v121
  %v258 = vpop.f32.mrf.mxu0
  %v259 = vadd.f32 %v68, %v258
  %v260 = vpop.f32.mrf.mxu0
  %v261 = vpop.f32.mrf.mxu0
  %v262 = vadd.f32 %v73, %v261
  %v263 = vpop.f32.mrf.mxu0
  %264 = vmatprep.mubr.bf16.mxu0 %v211
  %265 = vmatmul.mubr.bf16.gmra.mxu0 %v123
  %v266 = vpop.f32.mrf.mxu0
  %v267 = vadd.f32 %v78, %v266
  %v268 = vpop.f32.mrf.mxu0
  %v269 = vpop.f32.mrf.mxu0
  %v270 = vadd.f32 %v83, %v269
  %v271 = vpop.f32.mrf.mxu0
  %272 = vmatprep.mubr.bf16.mxu0 %v214
  %273 = vmatmul.mubr.bf16.gmra.mxu0 %v125
  %v274 = vpop.f32.mrf.mxu0
  %v275 = vadd.f32 %v88, %v274
  %v276 = vpop.f32.mrf.mxu0
  %v277 = vpop.f32.mrf.mxu0
  %v278 = vadd.f32 %v93, %v277
  %v279 = vpop.f32.mrf.mxu0
  %280 = vdwg.mxu0
  %v281 = vmax.f32 %v251, 0.0
  %v282 = vmax.f32 %v254, 0.0
  %v283 = vmax.f32 %v259, 0.0
  %v284 = vmax.f32 %v262, 0.0
  %v285 = vmax.f32 %v267, 0.0
  %v286 = vmax.f32 %v270, 0.0
  %v287 = vmax.f32 %v275, 0.0
  %v288 = vmax.f32 %v278, 0.0
  %289 = vst.msk [vmem:[%s3] sm:$0xff] %vm203, %v281
  %290 = vst.msk [vmem:[%s3 + $0x8] sm:$0xff] %vm203, %v282
  %291 = vst.msk [vmem:[%s3 + $0x10] sm:$0xff] %vm203, %v283
  %292 = vst.msk [vmem:[%s3 + $0x18] sm:$0xff] %vm203, %v284
  %293 = vst.msk [vmem:[%s3 + $0x20] sm:$0xff] %vm203, %v285
  %294 = vst.msk [vmem:[%s3 + $0x28] sm:$0xff] %vm203, %v286
  %295 = vst.msk [vmem:[%s3 + $0x30] sm:$0xff] %vm203, %v287
  %296 = vst.msk [vmem:[%s3 + $0x38] sm:$0xff] %vm203, %v288
  // Predicated region
  $region14: #{hourglass_forward.10} parent=0 // pred_check
    _
  $region15: #{hourglass_forward.10} parent=0 // pred_check_branch
    %298 = sbr.rel (0) target = $region17
  $region16: #{hourglass_forward.10} parent=0 // pred_region
    _
  $region17: #{hourglass_forward.10} parent=0 // pred_fallthru
    _
  // Predicated region
  $region18: #{hourglass_forward.10} parent=0 // pred_check
    _
  $region19: #{hourglass_forward.10} parent=0 // pred_check_branch
    %300 = sbr.rel (0) target = $region21
  $region20: #{hourglass_forward.10} parent=0 // pred_region
    _
  $region21: #{hourglass_forward.10} parent=0 // pred_fallthru
    _

// kernel: hourglass_forward.11
$region0: #{hourglass_forward.11}
  #allocation0 [shape = 'u32[]', space=smem, size = 0x4, offset = 0x4, fixed_abs, tag = 'smem constant byte address 0x4 - core index']
  #allocation1 [shape = 'u32[144,128]{1,0:T(1,128)}', space=vmem, size = 0x12000, scoped, tag = 'internal scratch']
  %s0 = inlined_call_operand.vmem [shape: bf16[32,96], index: 0, kind: input, shape index: {}]
  %s1 = inlined_call_operand.vmem [shape: bf16[96,512], index: 1, kind: input, shape index: {}]
  %s2 = inlined_call_operand.vmem [shape: f32[32,1], index: 2, kind: input, shape index: {}]
  %s3 = inlined_call_operand.vmem [shape: f32[32,512], index: 3, kind: output, shape index: {}]
  %s4 = sld [smem:[#allocation0]]
  $region102: #{hourglass_forward.11} parent=0
    _
  %s6 = ssub.s32 1, %s4
  %s7 = scalar_select 0, %s6, %s4
  $region1: #{hourglass_forward.11} parent=0
    #allocation2 [shape = 'u8[98304]{0}', space=vmem, size = 0x18000, scoped, tag = 'input window, operand 1']
    #allocation3 [shape = 'u8[65536]{0}', space=vmem, size = 0x10000, scoped, tag = 'output window, operand 0']
    loop: start=0, step=1, limit=4
    $region2: #{hourglass_forward.11} parent=1 // loop_pre_header
      _
    $region3: #{hourglass_forward.11} parent=1 // loop_header
      %s9 = sphi 0, %s13
      %p10 = scmp.ge.s32.totalorder %s9, 4
      %s17 = sphi 0, %s17
      %s19 = sphi 0, %s17
      %s20 = sphi 0, %s19
      %s34 = sphi 0, %s20
      %s40 = sphi 0, %s42
      %s43 = sphi 0, %s40
      %s44 = sphi 0, %s43
      %s60 = sphi 0, %s44
      %s64 = sphi 0, %s64
      %s66 = sphi 0, %s64
      %s67 = sphi 0, %s66
      %s81 = sphi 0, %s67
      %s87 = sphi 0, %s89
      %s90 = sphi 0, %s87
      %s91 = sphi 0, %s90
      %s107 = sphi 0, %s91
    $region4: #{hourglass_forward.11} parent=1 // loop_header_branch
      %12 = sbr.rel (%p10) target = $region8
    $region5: #{hourglass_forward.11} parent=1 // loop_body
      %s14 = ssub.s32 %s9, 1
      %s15 = ssub.s32 %s9, 2
      %s16 = sadd.s32 %s9, 1
      %s18 = sadd.s32 %s17, 1
      %p21 = scmp.eq.s32.totalorder %s9, 1
      %p22 = scmp.ne.s32.totalorder %s17, %s19
      %p23 = scmp.eq.s32.totalorder %s9, 0
      %p24 = por %p22, %p23
      %p25 = scmp.ne.s32.totalorder %s17, %s19
      %p26 = scmp.eq.s32.totalorder %s14, 1
      %p27 = por %p25, %p26
      %p28 = scmp.ne.s32.totalorder %s19, %s20
      %p29 = scmp.eq.s32.totalorder %s14, 0
      %p30 = por %p28, %p29
      %p31 = scmp.ne.s32.totalorder %s19, %s20
      %p32 = scmp.eq.s32.totalorder %s15, 1
      %p33 = por %p31, %p32
      %p35 = scmp.ne.s32.totalorder %s20, %s34
      %p36 = scmp.eq.s32.totalorder %s15, 0
      %p37 = por %p35, %p36
      %s38 = ssub.s32 %s9, %s16
      %p39 = scmp.eq.s32.totalorder %s38, 0
      %s41 = sadd.s32 %s40, 1
      %s42 = scalar_select %p39, %s40, %s41
      %p45 = pneg %p39
      %p46 = scmp.eq.s32.totalorder %s9, 1
      %p47 = por %p45, %p46
      %p48 = scmp.ne.s32.totalorder %s40, %s43
      %p49 = scmp.eq.s32.totalorder %s9, 0
      %p50 = por %p48, %p49
      %p51 = scmp.ne.s32.totalorder %s40, %s43
      %p52 = scmp.eq.s32.totalorder %s14, 1
      %p53 = por %p51, %p52
      %p54 = scmp.ne.s32.totalorder %s43, %s44
      %p55 = scmp.eq.s32.totalorder %s14, 0
      %p56 = por %p54, %p55
      %p57 = scmp.ne.s32.totalorder %s43, %s44
      %p58 = scmp.eq.s32.totalorder %s15, 1
      %p59 = por %p57, %p58
      %p61 = scmp.ne.s32.totalorder %s44, %s60
      %p62 = scmp.eq.s32.totalorder %s15, 0
      %p63 = por %p61, %p62
      %s65 = sadd.s32 %s64, 1
      %p68 = scmp.eq.s32.totalorder %s9, 1
      %p69 = scmp.ne.s32.totalorder %s64, %s66
      %p70 = scmp.eq.s32.totalorder %s9, 0
      %p71 = por %p69, %p70
      %p72 = scmp.ne.s32.totalorder %s64, %s66
      %p73 = scmp.eq.s32.totalorder %s14, 1
      %p74 = por %p72, %p73
      %p75 = scmp.ne.s32.totalorder %s66, %s67
      %p76 = scmp.eq.s32.totalorder %s14, 0
      %p77 = por %p75, %p76
      %p78 = scmp.ne.s32.totalorder %s66, %s67
      %p79 = scmp.eq.s32.totalorder %s15, 1
      %p80 = por %p78, %p79
      %p82 = scmp.ne.s32.totalorder %s67, %s81
      %p83 = scmp.eq.s32.totalorder %s15, 0
      %p84 = por %p82, %p83
      %s85 = ssub.s32 %s9, %s16
      %p86 = scmp.eq.s32.totalorder %s85, 0
      %s88 = sadd.s32 %s87, 1
      %s89 = scalar_select %p86, %s87, %s88
      %p92 = pneg %p86
      %p93 = scmp.eq.s32.totalorder %s9, 1
      %p94 = por %p92, %p93
      %p95 = scmp.ne.s32.totalorder %s87, %s90
      %p96 = scmp.eq.s32.totalorder %s9, 0
      %p97 = por %p95, %p96
      %p98 = scmp.ne.s32.totalorder %s87, %s90
      %p99 = scmp.eq.s32.totalorder %s14, 1
      %p100 = por %p98, %p99
      %p101 = scmp.ne.s32.totalorder %s90, %s91
      %p102 = scmp.eq.s32.totalorder %s14, 0
      %p103 = por %p101, %p102
      %p104 = scmp.ne.s32.totalorder %s90, %s91
      %p105 = scmp.eq.s32.totalorder %s15, 1
      %p106 = por %p104, %p105
      %p108 = scmp.ne.s32.totalorder %s91, %s107
      %p109 = scmp.eq.s32.totalorder %s15, 0
      %p110 = por %p108, %p109
      %p111 = scmp.le.s32.totalorder 1, %s9
      %p112 = scmp.lt.s32.totalorder %s9, 3
      %p113 = pnand %p111, %p112
      %p114 = pneg %p113
      // Predicated region
      $region9: #{hourglass_forward.11} parent=5 // pred_check
        _
      $region10: #{hourglass_forward.11} parent=5 // pred_check_branch
        %116 = sbr.rel (%p113) target = $region12
      $region11: #{hourglass_forward.11} parent=5 // pred_region
        %s117 = ssub.s32 %s9, 1
        // Predicated region
        $region13: #{hourglass_forward.11} parent=11 // pred_check
          %p118 = pneg %p30
        $region14: #{hourglass_forward.11} parent=11 // pred_check_branch
          %120 = sbr.rel (%p118) target = $region16
        $region15: #{hourglass_forward.11} parent=11 // pred_region
          _
        $region16: #{hourglass_forward.11} parent=11 // pred_fallthru
          _
        // Predicated region
        $region17: #{hourglass_forward.11} parent=11 // pred_check
          %p121 = pneg %p77
        $region18: #{hourglass_forward.11} parent=11 // pred_check_branch
          %123 = sbr.rel (%p121) target = $region20
        $region19: #{hourglass_forward.11} parent=11 // pred_region
          _
        $region20: #{hourglass_forward.11} parent=11 // pred_fallthru
          _
      $region12: #{hourglass_forward.11} parent=5 // pred_fallthru
        _
      %p124 = scmp.lt.s32.totalorder %s9, 2
      // Predicated region
      $region21: #{hourglass_forward.11} parent=5 // pred_check
        %p125 = pneg %p124
      $region22: #{hourglass_forward.11} parent=5 // pred_check_branch
        %127 = sbr.rel (%p125) target = $region24
      $region23: #{hourglass_forward.11} parent=5 // pred_region
        // Predicated region
        $region25: #{hourglass_forward.11} parent=23 // pred_check
          %p128 = pneg %p50
        $region26: #{hourglass_forward.11} parent=23 // pred_check_branch
          %130 = sbr.rel (%p128) target = $region28
        $region27: #{hourglass_forward.11} parent=23 // pred_region
          %s131 = sand.u32 %s40, 1
          %s132 = sand.u32 %s40, 1
          %s133 = smul.addr %s132, 96
          %s134 = scalar_lea.vmem [#allocation2], %s133
          %s135 = smul.u32 2, %s9
          %s136 = smul.addr %s135, 4
          %s137 = scalar_lea.vmem %s1, %s136
          // Predicated region
          $region29: #{hourglass_forward.11} parent=27 // pred_check
            _
          $region30: #{hourglass_forward.11} parent=27 // pred_check_branch
            %139 = sbr.rel (0) target = $region32
          $region31: #{hourglass_forward.11} parent=27 // pred_region
            // Predicated region
            $region33: #{hourglass_forward.11} parent=31 // pred_check
              _
            $region34: #{hourglass_forward.11} parent=31 // pred_check_branch
              %141 = sbr.rel (0) target = $region36
            $region35: #{hourglass_forward.11} parent=31 // pred_region
              // Predicated region
              $region48: #{hourglass_forward.11} parent=35 // pred_check
                _
              $region49: #{hourglass_forward.11} parent=35 // pred_check_branch
                %179 = sbr.rel (0) target = $region51
              $region50: #{hourglass_forward.11} parent=35 // pred_region
                loop: start=0, step=1, limit=1
                $region52: #{hourglass_forward.11} parent=50 // loop_pre_header
                  _
                $region53: #{hourglass_forward.11} parent=50 // loop_header
                  %s181 = sphi 0, %s185
                  %p182 = scmp.ge.s32.totalorder %s181, 1
                  %s186 = sphi %s137, %s137
                  %s187 = sphi %s134, %s134
                $region54: #{hourglass_forward.11} parent=50 // loop_header_branch
                  %184 = sbr.rel (%p182) target = $region58
                $region55: #{hourglass_forward.11} parent=50 // loop_body
                  %v188 = vld [vmem:[%s186] sm:$0xff]
                  %189 = vst [vmem:[%s187] sm:$0xff] %v188
                  %v190 = vld [vmem:[%s186 + $0x10] sm:$0xff]
                  %191 = vst [vmem:[%s187 + $0x8] sm:$0xff] %v190
                  %v192 = vld [vmem:[%s186 + $0x20] sm:$0xff]
                  %193 = vst [vmem:[%s187 + $0x10] sm:$0xff] %v192
                  %v194 = vld [vmem:[%s186 + $0x30] sm:$0xff]
                  %195 = vst [vmem:[%s187 + $0x18] sm:$0xff] %v194
                  %v196 = vld [vmem:[%s186 + $0x40] sm:$0xff]
                  %197 = vst [vmem:[%s187 + $0x20] sm:$0xff] %v196
                  %v198 = vld [vmem:[%s186 + $0x50] sm:$0xff]
                  %199 = vst [vmem:[%s187 + $0x28] sm:$0xff] %v198
                  %v200 = vld [vmem:[%s186 + $0x60] sm:$0xff]
                  %201 = vst [vmem:[%s187 + $0x30] sm:$0xff] %v200
                  %v202 = vld [vmem:[%s186 + $0x70] sm:$0xff]
                  %203 = vst [vmem:[%s187 + $0x38] sm:$0xff] %v202
                  %v204 = vld [vmem:[%s186 + $0x80] sm:$0xff]
                  %205 = vst [vmem:[%s187 + $0x40] sm:$0xff] %v204
                  %v206 = vld [vmem:[%s186 + $0x90] sm:$0xff]
                  %207 = vst [vmem:[%s187 + $0x48] sm:$0xff] %v206
                  %v208 = vld [vmem:[%s186 + $0xa0] sm:$0xff]
                  %209 = vst [vmem:[%s187 + $0x50] sm:$0xff] %v208
                  %v210 = vld [vmem:[%s186 + $0xb0] sm:$0xff]
                  %211 = vst [vmem:[%s187 + $0x58] sm:$0xff] %v210
                $region56: #{hourglass_forward.11} parent=50 // loop_footer
                  %s185 = sadd.s32 1, %s181
                $region57: #{hourglass_forward.11} parent=50 // loop_footer_branch
                  %180 = sbr.rel target = $region53
                $region58: #{hourglass_forward.11} parent=50 // loop_exit
                  _
              $region51: #{hourglass_forward.11} parent=35 // pred_fallthru
                _
              // Predicated region
              $region59: #{hourglass_forward.11} parent=35 // pred_check
                _
              $region60: #{hourglass_forward.11} parent=35 // pred_check_branch
                %213 = sbr.rel target = $region62
              $region61: #{hourglass_forward.11} parent=35 // pred_region
                _
              $region62: #{hourglass_forward.11} parent=35 // pred_fallthru
                _
            $region36: #{hourglass_forward.11} parent=31 // pred_fallthru
              _
            // Predicated region
            $region37: #{hourglass_forward.11} parent=31 // pred_check
              _
            $region38: #{hourglass_forward.11} parent=31 // pred_check_branch
              %143 = sbr.rel target = $region40
            $region39: #{hourglass_forward.11} parent=31 // pred_region
              %s145 = ssub.s32 256, 1
              loop: start=0, step=1, limit=1
              $region41: #{hourglass_forward.11} parent=39 // loop_pre_header
                _
              $region42: #{hourglass_forward.11} parent=39 // loop_header
                %s147 = sphi 0, %s151
                %p148 = scmp.ge.s32.totalorder %s147, 1
                %s152 = sphi %s137, %s137
                %s153 = sphi %s134, %s134
              $region43: #{hourglass_forward.11} parent=39 // loop_header_branch
                %150 = sbr.rel (%p148) target = $region47
              $region44: #{hourglass_forward.11} parent=39 // loop_body
                %v154 = vld [vmem:[%s152] sm:%s145]
                %155 = vst [vmem:[%s153] sm:%s145] %v154
                %v156 = vld [vmem:[%s152 + $0x10] sm:%s145]
                %157 = vst [vmem:[%s153 + $0x8] sm:%s145] %v156
                %v158 = vld [vmem:[%s152 + $0x20] sm:%s145]
                %159 = vst [vmem:[%s153 + $0x10] sm:%s145] %v158
                %v160 = vld [vmem:[%s152 + $0x30] sm:%s145]
                %161 = vst [vmem:[%s153 + $0x18] sm:%s145] %v160
                %v162 = vld [vmem:[%s152 + $0x40] sm:%s145]
                %163 = vst [vmem:[%s153 + $0x20] sm:%s145] %v162
                %v164 = vld [vmem:[%s152 + $0x50] sm:%s145]
                %165 = vst [vmem:[%s153 + $0x28] sm:%s145] %v164
                %v166 = vld [vmem:[%s152 + $0x60] sm:%s145]
                %167 = vst [vmem:[%s153 + $0x30] sm:%s145] %v166
                %v168 = vld [vmem:[%s152 + $0x70] sm:%s145]
                %169 = vst [vmem:[%s153 + $0x38] sm:%s145] %v168
                %v170 = vld [vmem:[%s152 + $0x80] sm:%s145]
                %171 = vst [vmem:[%s153 + $0x40] sm:%s145] %v170
                %v172 = vld [vmem:[%s152 + $0x90] sm:%s145]
                %173 = vst [vmem:[%s153 + $0x48] sm:%s145] %v172
                %v174 = vld [vmem:[%s152 + $0xa0] sm:%s145]
                %175 = vst [vmem:[%s153 + $0x50] sm:%s145] %v174
                %v176 = vld [vmem:[%s152 + $0xb0] sm:%s145]
                %177 = vst [vmem:[%s153 + $0x58] sm:%s145] %v176
              $region45: #{hourglass_forward.11} parent=39 // loop_footer
                %s151 = sadd.s32 1, %s147
              $region46: #{hourglass_forward.11} parent=39 // loop_footer_branch
                %146 = sbr.rel target = $region42
              $region47: #{hourglass_forward.11} parent=39 // loop_exit
                _
            $region40: #{hourglass_forward.11} parent=31 // pred_fallthru
              _
          $region32: #{hourglass_forward.11} parent=27 // pred_fallthru
            _
          %214 = vnop
        $region28: #{hourglass_forward.11} parent=23 // pred_fallthru
          _
      $region24: #{hourglass_forward.11} parent=5 // pred_fallthru
        _
      %p215 = scmp.le.s32.totalorder 1, %s9
      %p216 = scmp.lt.s32.totalorder %s9, 3
      %p217 = pnand %p215, %p216
      %p218 = pneg %p217
      // Predicated region
      $region63: #{hourglass_forward.11} parent=5 // pred_check
        _
      $region64: #{hourglass_forward.11} parent=5 // pred_check_branch
        %220 = sbr.rel (%p217) target = $region66
      $region65: #{hourglass_forward.11} parent=5 // pred_region
        %s221 = ssub.s32 %s9, 1
        %s222 = sand.u32 %s43, 1
        %s223 = sand.u32 %s43, 1
        %s224 = smul.addr %s223, 96
        %s225 = scalar_lea.vmem [#allocation2], %s224
        // Predicated region
        $region67: #{hourglass_forward.11} parent=65 // pred_check
          %p226 = pneg %p56
        $region68: #{hourglass_forward.11} parent=65 // pred_check_branch
          %228 = sbr.rel (%p226) target = $region70
        $region69: #{hourglass_forward.11} parent=65 // pred_region
          _
        $region70: #{hourglass_forward.11} parent=65 // pred_fallthru
          _
        %p229 = pneg %p30
        %p230 = pneg %p27
        %s231 = sand.u32 %s43, 1
        %s232 = sand.u32 %s43, 1
        %s233 = smul.addr %s232, 96
        %s234 = scalar_lea.vmem [#allocation2], %s233
        %p235 = pneg %p56
        %p236 = pneg %p53
        %p237 = pneg %p77
        %p238 = pneg %p74
        %p239 = pneg %p103
        %p240 = pneg %p100
        %s241 = sand.u32 %s90, 1
        %s242 = sand.u32 %s90, 1
        %s243 = smul.addr %s242, 64
        %s244 = scalar_lea.vmem [#allocation3], %s243
        %s245 = smul.u32 2, %s14
        %s246 = smul.u32 2, %s14
        %v248 = vld [vmem:[%s0] sm:$0xf]
        %v249 = vld [vmem:[%s0 + $0x4] sm:$0xf]
        %v250 = vld [vmem:[%s0 + $0x8] sm:$0xf]
        %v251 = vld [vmem:[%s0 + $0xc] sm:$0xf]
        %v252 = vld [vmem:[%s225] sm:$0xff]
        %v253 = vld [vmem:[%s225 + $0x8] sm:$0xff]
        %v254 = vld [vmem:[%s225 + $0x10] sm:$0xff]
        %v255 = vld [vmem:[%s225 + $0x18] sm:$0xff]
        %v256 = vld [vmem:[%s225 + $0x20] sm:$0xff]
        %v257 = vld [vmem:[%s225 + $0x28] sm:$0xff]
        %v258 = vld [vmem:[%s225 + $0x30] sm:$0xff]
        %v259 = vld [vmem:[%s225 + $0x38] sm:$0xff]
        %v260 = vld [vmem:[%s225 + $0x40] sm:$0xff]
        %v261 = vld [vmem:[%s225 + $0x48] sm:$0xff]
        %v262 = vld [vmem:[%s225 + $0x50] sm:$0xff]
        %v263 = vld [vmem:[%s225 + $0x58] sm:$0xff]
        %v264 = vld [vmem:[%s2] sm:$0xff]
        %v265 = vld [vmem:[%s2 + $0x8] sm:$0xff]
        %v266 = vld [vmem:[%s2 + $0x10] sm:$0xff]
        %v267 = vld [vmem:[%s2 + $0x18] sm:$0xff]
        %269 = vset.pattern.permute.xlu0 0
        %270 = vperm.xlu0 %269, %v264
        %v271 = vpop.permute.xlu0 %270
        %274 = vset.pattern.permute.xlu0 0
        %275 = vperm.xlu0 %274, %v265
        %v276 = vpop.permute.xlu0 %275
        %279 = vset.pattern.permute.xlu0 0
        %280 = vperm.xlu0 %279, %v266
        %v281 = vpop.permute.xlu0 %280
        %284 = vset.pattern.permute.xlu0 0
        %285 = vperm.xlu0 %284, %v267
        %v286 = vpop.permute.xlu0 %285
        %v292 = vunpack.c.l.b16 %v248
        %v293 = vunpack.c.l.b16 %v249
        %v294 = vunpack.c.l.b16 %v250
        %v295 = vunpack.c.l.b16 %v251
        %v296 = vpack.c.b16 %v293, %v292
        %v297 = vpack.c.b16 %v295, %v294
        %v310 = vunpack.c.l.b16 %v252
        %v311 = vunpack.c.h.b16 %v252
        %v312 = vunpack.c.l.b16 %v253
        %v313 = vunpack.c.h.b16 %v253
        %v314 = vunpack.c.l.b16 %v254
        %v315 = vunpack.c.h.b16 %v254
        %v316 = vunpack.c.l.b16 %v255
        %v317 = vunpack.c.h.b16 %v255
        %v318 = vunpack.c.l.b16 %v256
        %v319 = vunpack.c.h.b16 %v256
        %v320 = vunpack.c.l.b16 %v257
        %v321 = vunpack.c.h.b16 %v257
        %v322 = vunpack.c.l.b16 %v258
        %v323 = vunpack.c.h.b16 %v258
        %v324 = vunpack.c.l.b16 %v259
        %v325 = vunpack.c.h.b16 %v259
        %v326 = vunpack.c.l.b16 %v260
        %v327 = vunpack.c.h.b16 %v260
        %v328 = vunpack.c.l.b16 %v261
        %v329 = vunpack.c.h.b16 %v261
        %v330 = vunpack.c.l.b16 %v262
        %v331 = vunpack.c.h.b16 %v262
        %v332 = vunpack.c.l.b16 %v263
        %v333 = vunpack.c.h.b16 %v263
        %v334 = vpack.c.b16 %v312, %v310
        %v335 = vpack.c.b16 %v313, %v311
        %v336 = vpack.c.b16 %v316, %v314
        %v337 = vpack.c.b16 %v317, %v315
        %v338 = vpack.c.b16 %v320, %v318
        %v339 = vpack.c.b16 %v321, %v319
        %v340 = vpack.c.b16 %v324, %v322
        %v341 = vpack.c.b16 %v325, %v323
        %v342 = vpack.c.b16 %v328, %v326
        %v343 = vpack.c.b16 %v329, %v327
        %v344 = vpack.c.b16 %v332, %v330
        %v345 = vpack.c.b16 %v333, %v331
        %vm358 = vcmask 785408
        %v360 = vsel %vm358, %v296, 0
        %v363 = vsel %vm358, %v297, 0
        %365 = vmatprep.subr.bf16.mxu0 0
        %366 = vmatpush1.bf16.msra.mxu0 0
        %367 = vmatprep.subr.bf16.mxu0 0
        %368 = vmatpush1.bf16.msra.mxu0 0
        %369 = vmatprep.subr.bf16.mxu0 %v345
        %370 = vmatpush1.bf16.msra.mxu0 %v344
        %371 = vmatprep.subr.bf16.mxu0 %v343
        %372 = vmatpush1.bf16.msra.mxu0 %v342
        %373 = vmatprep.subr.bf16.mxu0 %v341
        %374 = vmatpush1.bf16.msra.mxu0 %v340
        %375 = vmatprep.subr.bf16.mxu0 %v339
        %376 = vmatpush1.bf16.msra.mxu0 %v338
        %377 = vmatprep.subr.bf16.mxu0 %v337
        %378 = vmatpush1.bf16.msra.mxu0 %v336
        %379 = vmatprep.subr.bf16.mxu0 %v335
        %380 = vmatpush1.bf16.msra.mxu0 %v334
        %381 = vmatprep.subr.bf16.mxu0 0
        %382 = vmatpush2.bf16.msra.mxu0 0
        %383 = vmatprep.subr.bf16.mxu0 0
        %384 = vmatpush2.bf16.msra.mxu0 0
        %385 = vmatprep.subr.bf16.mxu0 0
        %386 = vmatpush2.bf16.msra.mxu0 0
        %387 = vmatprep.subr.bf16.mxu0 0
        %388 = vmatpush2.bf16.msra.mxu0 0
        %389 = vmatprep.subr.bf16.mxu0 0
        %390 = vmatpush2.bf16.msra.mxu0 0
        %391 = vmatprep.subr.bf16.mxu0 0
        %392 = vmatpush2.bf16.msra.mxu0 0
        %393 = vmatprep.subr.bf16.mxu0 0
        %394 = vmatpush2.bf16.msra.mxu0 0
        %395 = vmatprep.subr.bf16.mxu0 0
        %396 = vmatpush2.bf16.msra.mxu0 0
        %397 = vmatprep.mubr.bf16.mxu0 0
        %398 = vmatmul.mubr.bf16.gmra.mxu0 %v360
        %v399 = vpop.f32.mrf.mxu0
        %v400 = vadd.f32 %v271, %v399
        %v401 = vpop.f32.mrf.mxu0
        %v402 = vadd.f32 %v271, %v401
        %v403 = vpop.f32.mrf.mxu0
        %v404 = vadd.f32 %v276, %v403
        %v405 = vpop.f32.mrf.mxu0
        %v406 = vadd.f32 %v276, %v405
        %407 = vmatprep.mubr.bf16.mxu0 0
        %408 = vmatmul.mubr.bf16.gmra.mxu0 %v363
        %v409 = vpop.f32.mrf.mxu0
        %v410 = vadd.f32 %v281, %v409
        %v411 = vpop.f32.mrf.mxu0
        %v412 = vadd.f32 %v281, %v411
        %v413 = vpop.f32.mrf.mxu0
        %v414 = vadd.f32 %v286, %v413
        %v415 = vpop.f32.mrf.mxu0
        %v416 = vadd.f32 %v286, %v415
        %417 = vdwg.mxu0
        %v418 = vmax.f32 %v400, 0.0
        %v419 = vmax.f32 %v402, 0.0
        %v420 = vmax.f32 %v404, 0.0
        %v421 = vmax.f32 %v406, 0.0
        %v422 = vmax.f32 %v410, 0.0
        %v423 = vmax.f32 %v412, 0.0
        %v424 = vmax.f32 %v414, 0.0
        %v425 = vmax.f32 %v416, 0.0
        %426 = vst [vmem:[%s244] sm:$0xff] %v418
        %427 = vst [vmem:[%s244 + $0x8] sm:$0xff] %v419
        %428 = vst [vmem:[%s244 + $0x10] sm:$0xff] %v420
        %429 = vst [vmem:[%s244 + $0x18] sm:$0xff] %v421
        %430 = vst [vmem:[%s244 + $0x20] sm:$0xff] %v422
        %431 = vst [vmem:[%s244 + $0x28] sm:$0xff] %v423
        %432 = vst [vmem:[%s244 + $0x30] sm:$0xff] %v424
        %433 = vst [vmem:[%s244 + $0x38] sm:$0xff] %v425
        %s434 = sand.u32 %s90, 1
        %s435 = sand.u32 %s90, 1
        %s436 = smul.addr %s435, 64
        %s437 = scalar_lea.vmem [#allocation3], %s436
        // Predicated region
        $region71: #{hourglass_forward.11} parent=65 // pred_check
          %p438 = pneg %p100
        $region72: #{hourglass_forward.11} parent=65 // pred_check_branch
          %440 = sbr.rel (%p438) target = $region74
        $region73: #{hourglass_forward.11} parent=65 // pred_region
          %s441 = smul.u32 2, %s14
          %s442 = smul.addr %s441, 8
          %s443 = scalar_lea.vmem %s3, %s442
          // Predicated region
          $region75: #{hourglass_forward.11} parent=73 // pred_check
            _
          $region76: #{hourglass_forward.11} parent=73 // pred_check_branch
            %445 = sbr.rel (0) target = $region78
          $region77: #{hourglass_forward.11} parent=73 // pred_region
            // Predicated region
            $region79: #{hourglass_forward.11} parent=77 // pred_check
              _
            $region80: #{hourglass_forward.11} parent=77 // pred_check_branch
              %447 = sbr.rel (0) target = $region82
            $region81: #{hourglass_forward.11} parent=77 // pred_region
              loop: start=0, step=1, limit=1
              $region83: #{hourglass_forward.11} parent=81 // loop_pre_header
                _
              $region84: #{hourglass_forward.11} parent=81 // loop_header
                %s449 = sphi 0, %s453
                %p450 = scmp.ge.s32.totalorder %s449, 1
                %s454 = sphi %s437, %s437
                %s455 = sphi %s443, %s443
              $region85: #{hourglass_forward.11} parent=81 // loop_header_branch
                %452 = sbr.rel (%p450) target = $region89
              $region86: #{hourglass_forward.11} parent=81 // loop_body
                %v456 = vld [vmem:[%s454] sm:$0xff]
                %457 = vst [vmem:[%s455] sm:$0xff] %v456
                %v458 = vld [vmem:[%s454 + $0x8] sm:$0xff]
                %459 = vst [vmem:[%s455 + $0x8] sm:$0xff] %v458
                %v460 = vld [vmem:[%s454 + $0x10] sm:$0xff]
                %461 = vst [vmem:[%s455 + $0x20] sm:$0xff] %v460
                %v462 = vld [vmem:[%s454 + $0x18] sm:$0xff]
                %463 = vst [vmem:[%s455 + $0x28] sm:$0xff] %v462
                %v464 = vld [vmem:[%s454 + $0x20] sm:$0xff]
                %465 = vst [vmem:[%s455 + $0x40] sm:$0xff] %v464
                %v466 = vld [vmem:[%s454 + $0x28] sm:$0xff]
                %467 = vst [vmem:[%s455 + $0x48] sm:$0xff] %v466
                %v468 = vld [vmem:[%s454 + $0x30] sm:$0xff]
                %469 = vst [vmem:[%s455 + $0x60] sm:$0xff] %v468
                %v470 = vld [vmem:[%s454 + $0x38] sm:$0xff]
                %471 = vst [vmem:[%s455 + $0x68] sm:$0xff] %v470
              $region87: #{hourglass_forward.11} parent=81 // loop_footer
                %s453 = sadd.s32 1, %s449
              $region88: #{hourglass_forward.11} parent=81 // loop_footer_branch
                %448 = sbr.rel target = $region84
              $region89: #{hourglass_forward.11} parent=81 // loop_exit
                _
            $region82: #{hourglass_forward.11} parent=77 // pred_fallthru
              _
            // Predicated region
            $region90: #{hourglass_forward.11} parent=77 // pred_check
              _
            $region91: #{hourglass_forward.11} parent=77 // pred_check_branch
              %473 = sbr.rel target = $region93
            $region92: #{hourglass_forward.11} parent=77 // pred_region
              _
            $region93: #{hourglass_forward.11} parent=77 // pred_fallthru
              _
          $region78: #{hourglass_forward.11} parent=73 // pred_fallthru
            _
          %474 = vnop
        $region74: #{hourglass_forward.11} parent=65 // pred_fallthru
          _
      $region66: #{hourglass_forward.11} parent=5 // pred_fallthru
        _
      %p475 = scmp.le.s32.totalorder 2, %s9
      // Predicated region
      $region94: #{hourglass_forward.11} parent=5 // pred_check
        %p476 = pneg %p475
      $region95: #{hourglass_forward.11} parent=5 // pred_check_branch
        %478 = sbr.rel (%p476) target = $region97
      $region96: #{hourglass_forward.11} parent=5 // pred_region
        %s479 = ssub.s32 %s9, 2
        // Predicated region
        $region98: #{hourglass_forward.11} parent=96 // pred_check
          %p480 = pneg %p106
        $region99: #{hourglass_forward.11} parent=96 // pred_check_branch
          %482 = sbr.rel (%p480) target = $region101
        $region100: #{hourglass_forward.11} parent=96 // pred_region
          %s483 = sand.u32 %s91, 1
          %s484 = sand.u32 %s91, 1
          %s485 = smul.addr %s484, 64
          %s486 = scalar_lea.vmem [#allocation3], %s485
        $region101: #{hourglass_forward.11} parent=96 // pred_fallthru
          _
      $region97: #{hourglass_forward.11} parent=5 // pred_fallthru
        _
    $region6: #{hourglass_forward.11} parent=1 // loop_footer
      %s13 = sadd.s32 1, %s9
    $region7: #{hourglass_forward.11} parent=1 // loop_footer_branch
      %8 = sbr.rel target = $region3
    $region8: #{hourglass_forward.11} parent=1 // loop_exit
      _

</llo_original>
